<compile_context>
chip_gen: v6e
topology: v6e:2x2x1
jax: 0.10.0
libtpu: 0.0.40
codegen_flags: <defaults>
</compile_context>

<pallas_src>
import functools

import jax
import jax.numpy as jnp
from jax.experimental import pallas as pl
from jax.experimental.pallas import tpu as pltpu


def _round_up(x, m):
    return (x + m - 1) // m * m


# ---------------------------------------------------------------------------
# Fused 3-layer GCN kernel
#   grid = (num_layers=3, num_row_tiles)   -- both axes strictly sequential
#   t0_ref : (n_pad, f_pad) bf16   T0 = X @ W1 (precomputed, VMEM-resident)
#   a_ref  : (tm, n_pad)    bf16   A_hat row tile (streamed once per layer)
#   w_ref  : (1, f_pad, f_pad) bf16  W of the NEXT layer (W2 for l=0, W3 for l>=1)
#   b_ref  : (1, 1, f_pad)  f32    bias of the current layer
#   o_ref  : (tm, f_pad)    f32    output row tile (written only on last layer)
#   t1_scr, t2_scr : (n_pad, f_pad) bf16  ping-pong T buffers (layer 1 / layer 2 inputs)
# ---------------------------------------------------------------------------
def _gcn_fused_kernel(t0_ref, a_ref, w_ref, b_ref, o_ref, t1_scr, t2_scr, *, tm):
    l = pl.program_id(0)   # layer index (outer, sequential)
    i = pl.program_id(1)   # row-tile index (inner)
    row0 = pl.multiple_of(i * tm, tm)

    def layer(t_src, t_dst_ref):
        # Normalized aggregation for this row tile: bf16 x bf16 -> f32 on the MXU.
        rows = jnp.dot(a_ref[...], t_src, preferred_element_type=jnp.float32)
        rows = rows + b_ref[0]                      # bias broadcast (f32 epilogue)
        if t_dst_ref is None:
            # Final layer: no ReLU, single HBM writeback of the result tile.
            o_ref[...] = rows.astype(o_ref.dtype)
        else:
            h = jnp.maximum(rows, 0.0).astype(jnp.bfloat16)
            # Distributed next-layer transform: this tile's rows of T_{l+1}.
            t_next = jnp.dot(h, w_ref[0], preferred_element_type=jnp.float32)
            t_dst_ref[pl.ds(row0, tm), :] = t_next.astype(t_dst_ref.dtype)

    @pl.when(l == 0)
    def _():
        layer(t0_ref[...], t1_scr)

    @pl.when(l == 1)
    def _():
        layer(t1_scr[...], t2_scr)

    @pl.when(l == 2)
    def _():
        layer(t2_scr[...], None)


# ---------------------------------------------------------------------------
# Normalized adjacency A_hat = D^{-1/2}(A+I)D^{-1/2}, zero-padded, bf16.
# ---------------------------------------------------------------------------
def build_normalized_adjacency(edge_index, num_nodes, num_padded,
                               dtype=jnp.bfloat16):
    src = edge_index[0]
    dst = edge_index[1]
    a = jnp.zeros((num_nodes, num_nodes), jnp.float32)
    # message j -> i  =>  A_hat[i, j];  .add keeps PyG multigraph semantics
    a = a.at[dst, src].add(1.0)
    a = a + jnp.eye(num_nodes, dtype=jnp.float32)   # add_self_loops
    deg = jnp.sum(a, axis=1)
    dinv = jnp.where(deg > 0, jax.lax.rsqrt(deg), 0.0)
    a_hat = dinv[:, None] * a * dinv[None, :]
    a_pad = jnp.zeros((num_padded, num_padded), dtype)
    return a_pad.at[:num_nodes, :num_nodes].set(a_hat.astype(dtype))


# ---------------------------------------------------------------------------
# Full GCN forward: conv1 -> relu -> conv2 -> relu -> conv3 (single pallas_call)
# ---------------------------------------------------------------------------
def gcn_forward(params, x, edge_index):
    n, f_in = x.shape
    hidden = params["w1"].shape[1]
    classes = params["w3"].shape[1]
    num_layers = 3
    last = num_layers - 1

    # Lane-dense kernel feature dim (only hidden/classes; raw f_in never enters).
    f_pad = max(_round_up(hidden, 128), _round_up(classes, 128))
    n_pad = _round_up(n, 128)
    # Bigger row tiles -> closer to HBM roofline on the A_hat stream; keep <=256
    # so the double-buffered (tm, n_pad) bf16 A tiles fit v7x's 64 MiB VMEM.
    tm = 256 if n_pad % 256 == 0 else 128

    # Layer-0 transform precomputed once in the wrapper (XLA matmul, f32 -> bf16).
    t0 = (x @ params["w1"]).astype(jnp.bfloat16)                       # (n, hidden)
    t0_p = jnp.zeros((n_pad, f_pad), jnp.bfloat16).at[:n, :hidden].set(t0)

    def pad_w(w):
        return jnp.zeros((f_pad, f_pad), jnp.bfloat16).at[
            : w.shape[0], : w.shape[1]].set(w.astype(jnp.bfloat16))

    def pad_b(b):
        return jnp.zeros((f_pad,), jnp.float32).at[: b.shape[0]].set(b)

    # Only W2, W3 are needed inside the kernel (layer l computes T_{l+1}).
    w_stack = jnp.stack([pad_w(params["w2"]), pad_w(params["w3"])])    # (2, f_pad, f_pad)
    b_stack = jnp.stack([pad_b(params["b1"]), pad_b(params["b2"]), pad_b(params["b3"])])
    b_stack = b_stack[:, None, :]                                      # (3, 1, f_pad)

    a_hat = build_normalized_adjacency(edge_index, n, n_pad)           # (n_pad, n_pad) bf16

    grid = (num_layers, n_pad // tm)

    # Explicit scoped-VMEM budget: resident T0 + 2 T scratch + double-buffered
    # A tiles / W / bias / out tile, plus headroom.
    vmem_bytes = (
        n_pad * f_pad * 2            # T0 (resident input block)
        + 2 * n_pad * f_pad * 2      # T ping-pong scratch
        + 2 * tm * n_pad * 2         # A_hat tile, double buffered
        + 2 * f_pad * f_pad * 2      # W block, double buffered
        + 2 * f_pad * 4              # bias
        + 2 * tm * f_pad * 4         # out tile
    )
    vmem_limit = int(min(96 * 2**20, max(32 * 2**20, int(1.5 * vmem_bytes))))

    kernel = functools.partial(_gcn_fused_kernel, tm=tm)

    out = pl.pallas_call(
        kernel,
        out_shape=jax.ShapeDtypeStruct((n_pad, f_pad), jnp.float32),
        grid=grid,
        in_specs=[
            pl.BlockSpec((n_pad, f_pad), lambda l, i: (0, 0)),              # T0 (resident)
            pl.BlockSpec((tm, n_pad), lambda l, i: (i, 0)),                 # A_hat row tile
            pl.BlockSpec((1, f_pad, f_pad),
                         lambda l, i: (jnp.minimum(l, 1), 0, 0)),           # W_{next layer}
            pl.BlockSpec((1, 1, f_pad), lambda l, i: (l, 0, 0)),            # b_l
        ],
        # Non-final layers never touch the output: pin the block index at 0 so
        # each (tm, f_pad) output tile is written back to HBM exactly once.
        out_specs=pl.BlockSpec(
            (tm, f_pad), lambda l, i: (jnp.where(l == last, i, 0), 0)),
        scratch_shapes=[
            pltpu.VMEM((n_pad, f_pad), jnp.bfloat16),   # T1 (layer-1 input)
            pltpu.VMEM((n_pad, f_pad), jnp.bfloat16),   # T2 (layer-2 input)
        ],
        compiler_params=pltpu.CompilerParams(
            # Row tiles of layer l write the shared T scratch consumed by layer
            # l+1, so both grid axes must stay sequential on a single TC.
            dimension_semantics=("arbitrary", "arbitrary"),
            vmem_limit_bytes=vmem_limit,
        ),
    )(t0_p, a_hat, w_stack, b_stack)

    return out[:n, :classes]


def init_params(key, in_features, hidden, classes):
    k1, k2, k3 = jax.random.split(key, 3)

    def glorot(k, fan_in, fan_out):
        limit = jnp.sqrt(6.0 / (fan_in + fan_out))
        return jax.random.uniform(
            k, (fan_in, fan_out), jnp.float32, minval=-limit, maxval=limit)

    return {
        "w1": glorot(k1, in_features, hidden),
        "b1": jnp.zeros((hidden,), jnp.float32),
        "w2": glorot(k2, hidden, hidden),
        "b2": jnp.zeros((hidden,), jnp.float32),
        "w3": glorot(k3, hidden, classes),
        "b3": jnp.zeros((classes,), jnp.float32),
    }


if __name__ == "__main__":
    # Small synthetic problem: N=64 nodes, 16 input features, hidden=32, 8 classes.
    N = 64
    IN_FEATURES = 16
    HIDDEN = 32
    CLASSES = 8

    key = jax.random.PRNGKey(0)
    k_x, k_p = jax.random.split(key)

    # Node features
    X = jax.random.normal(k_x, (N, IN_FEATURES), dtype=jnp.float32)

    # Deterministic edge_index: undirected ring graph (both directions), [2, 2N]
    nodes = jnp.arange(N, dtype=jnp.int32)
    nxt = (nodes + 1) % N
    src = jnp.concatenate([nodes, nxt])
    dst = jnp.concatenate([nxt, nodes])
    edge_index = jnp.stack([src, dst], axis=0)

    params = init_params(k_p, IN_FEATURES, HIDDEN, CLASSES)

    fwd = jax.jit(gcn_forward)
    out = jax.block_until_ready(fwd(params, X, edge_index))

    assert out.shape == (N, CLASSES), out.shape
    assert out.dtype == jnp.float32
    assert bool(jnp.all(jnp.isfinite(out)))

    # Pure-JAX dense reference (f32 end to end) for a correctness cross-check.
    def ref_forward(params, x, edge_index):
        a = jnp.zeros((N, N), jnp.float32).at[edge_index[1], edge_index[0]].add(1.0)
        a = a + jnp.eye(N, dtype=jnp.float32)
        d = jnp.sum(a, axis=1)
        dinv = jnp.where(d > 0, 1.0 / jnp.sqrt(d), 0.0)
        a_hat = dinv[:, None] * a * dinv[None, :]
        h = jnp.maximum(a_hat @ (x @ params["w1"]) + params["b1"], 0.0)
        h = jnp.maximum(a_hat @ (h @ params["w2"]) + params["b2"], 0.0)
        return a_hat @ (h @ params["w3"]) + params["b3"]

    ref = ref_forward(params, X, edge_index)
    max_err = float(jnp.max(jnp.abs(out - ref)))
    assert max_err < 5e-2, max_err   # bf16 A_hat / T / W tolerance

    print("KERNEL_OK")
</pallas_src>

<mosaic_0001>
module attributes {stable_mosaic.version = 11 : i64} {
  func.func private @main(%arg0: i32) attributes {dimension_semantics = [#tpu.dimension_semantics<core_parallel>], iteration_bounds = array<i64: 2>, tpu.core_type = #tpu.core_type<sc_scalar_subcore>, window_params = []} {
    return
  }
}

module attributes {stable_mosaic.version = 11 : i64} {
  func.func private @main(%arg0: i32) attributes {dimension_semantics = [#tpu.dimension_semantics<core_parallel>], iteration_bounds = array<i64: 2>, tpu.core_type = #tpu.core_type<sc_scalar_subcore>, window_params = []} {
    return
  }
}

module attributes {stable_mosaic.version = 11 : i64} {
  func.func @_gcn_fused_kernel(%arg0: i32, %arg1: i32, %arg2: memref<128x128xbf16, #tpu.memory_space<vmem>>, %arg3: memref<128x128xbf16, #tpu.memory_space<vmem>>, %arg4: memref<1x128x128xbf16, #tpu.memory_space<vmem>>, %arg5: memref<1x1x128xf32, #tpu.memory_space<vmem>>, %arg6: memref<128x128xf32, #tpu.memory_space<vmem>>, %arg7: memref<128x128xbf16, #tpu.memory_space<vmem>>, %arg8: memref<128x128xbf16, #tpu.memory_space<vmem>>) attributes {dimension_semantics = [#tpu.dimension_semantics<arbitrary>, #tpu.dimension_semantics<arbitrary>], iteration_bounds = array<i64: 3, 1>, scalar_prefetch = 0 : i64, scratch_operands = 2 : i64, tpu.core_type = #tpu.core_type<tc>, window_params = [{pipeline_mode = #tpu.pipeline_mode<synchronous>, transform_indices = @transform_0, window_bounds = array<i64: 128, 128>}, {transform_indices = @transform_1, window_bounds = array<i64: 128, 128>}, {transform_indices = @transform_2, window_bounds = array<i64: 1, 128, 128>}, {transform_indices = @transform_3, window_bounds = array<i64: 1, 1, 128>}, {transform_indices = @transform_4, window_bounds = array<i64: 128, 128>}]} {
    %c128_i32 = arith.constant 128 : i32
    %0 = arith.muli %arg1, %c128_i32 : i32
    %1 = tpu.assume_multiple %0, 128 : i32
    %c0_i32 = arith.constant 0 : i32
    %2 = arith.cmpi eq, %arg0, %c0_i32 : i32
    %3 = arith.extui %2 : i1 to i32
    %c0_i32_0 = arith.constant 0 : i32
    %4 = arith.cmpi ne, %3, %c0_i32_0 : i32
    scf.if %4 {
      %c0 = arith.constant 0 : index
      %c0_3 = arith.constant 0 : index
      %11 = vector.load %arg2[%c0, %c0_3] : memref<128x128xbf16, #tpu.memory_space<vmem>>, vector<128x128xbf16>
      %c0_4 = arith.constant 0 : index
      %c0_5 = arith.constant 0 : index
      %12 = vector.load %arg3[%c0_4, %c0_5] : memref<128x128xbf16, #tpu.memory_space<vmem>>, vector<128x128xbf16>
      %cst = arith.constant dense<0.000000e+00> : vector<128x128xf32>
      %13 = tpu.matmul %12, %11, %cst {dimension_numbers = #tpu.dot_dimension_numbers<[1], [0], [0], [1], [0, 0, 1, 1], [], []>} : vector<128x128xbf16>, vector<128x128xbf16>, vector<128x128xf32> -> vector<128x128xf32>
      %c0_6 = arith.constant 0 : index
      %c0_7 = arith.constant 0 : index
      %c0_8 = arith.constant 0 : index
      %14 = vector.load %arg5[%c0_6, %c0_7, %c0_8] : memref<1x1x128xf32, #tpu.memory_space<vmem>>, vector<1x1x128xf32>
      %15 = vector.shape_cast %14 : vector<1x1x128xf32> to vector<1x128xf32>
      %16 = vector.broadcast %15 : vector<1x128xf32> to vector<128x128xf32>
      %17 = arith.addf %13, %16 : vector<128x128xf32>
      %cst_9 = arith.constant 0.000000e+00 : f32
      %18 = vector.broadcast %cst_9 : f32 to vector<128x128xf32>
      %19 = arith.maximumf %17, %18 : vector<128x128xf32>
      %20 = arith.truncf %19 : vector<128x128xf32> to vector<128x128xbf16>
      %c0_10 = arith.constant 0 : index
      %c0_11 = arith.constant 0 : index
      %c0_12 = arith.constant 0 : index
      %21 = vector.load %arg4[%c0_10, %c0_11, %c0_12] : memref<1x128x128xbf16, #tpu.memory_space<vmem>>, vector<1x128x128xbf16>
      %22 = vector.shape_cast %21 : vector<1x128x128xbf16> to vector<128x128xbf16>
      %cst_13 = arith.constant dense<0.000000e+00> : vector<128x128xf32>
      %23 = tpu.matmul %20, %22, %cst_13 {dimension_numbers = #tpu.dot_dimension_numbers<[1], [0], [0], [1], [0, 0, 1, 1], [], []>} : vector<128x128xbf16>, vector<128x128xbf16>, vector<128x128xf32> -> vector<128x128xf32>
      %24 = arith.truncf %23 : vector<128x128xf32> to vector<128x128xbf16>
      %25 = arith.index_cast %1 : i32 to index
      %c0_14 = arith.constant 0 : index
      %26 = vector.load %arg7[%25, %c0_14] : memref<128x128xbf16, #tpu.memory_space<vmem>>, vector<128x128xbf16>
      tpu.vector_store %arg7[%25, %c0_14], %24 {strides = array<i32>} : memref<128x128xbf16, #tpu.memory_space<vmem>>, vector<128x128xbf16>,
    } else {
    }
    %c1_i32 = arith.constant 1 : i32
    %5 = arith.cmpi eq, %arg0, %c1_i32 : i32
    %6 = arith.extui %5 : i1 to i32
    %c0_i32_1 = arith.constant 0 : i32
    %7 = arith.cmpi ne, %6, %c0_i32_1 : i32
    scf.if %7 {
      %c0 = arith.constant 0 : index
      %c0_3 = arith.constant 0 : index
      %11 = vector.load %arg7[%c0, %c0_3] : memref<128x128xbf16, #tpu.memory_space<vmem>>, vector<128x128xbf16>
      %c0_4 = arith.constant 0 : index
      %c0_5 = arith.constant 0 : index
      %12 = vector.load %arg3[%c0_4, %c0_5] : memref<128x128xbf16, #tpu.memory_space<vmem>>, vector<128x128xbf16>
      %cst = arith.constant dense<0.000000e+00> : vector<128x128xf32>
      %13 = tpu.matmul %12, %11, %cst {dimension_numbers = #tpu.dot_dimension_numbers<[1], [0], [0], [1], [0, 0, 1, 1], [], []>} : vector<128x128xbf16>, vector<128x128xbf16>, vector<128x128xf32> -> vector<128x128xf32>
      %c0_6 = arith.constant 0 : index
      %c0_7 = arith.constant 0 : index
      %c0_8 = arith.constant 0 : index
      %14 = vector.load %arg5[%c0_6, %c0_7, %c0_8] : memref<1x1x128xf32, #tpu.memory_space<vmem>>, vector<1x1x128xf32>
      %15 = vector.shape_cast %14 : vector<1x1x128xf32> to vector<1x128xf32>
      %16 = vector.broadcast %15 : vector<1x128xf32> to vector<128x128xf32>
      %17 = arith.addf %13, %16 : vector<128x128xf32>
      %cst_9 = arith.constant 0.000000e+00 : f32
      %18 = vector.broadcast %cst_9 : f32 to vector<128x128xf32>
      %19 = arith.maximumf %17, %18 : vector<128x128xf32>
      %20 = arith.truncf %19 : vector<128x128xf32> to vector<128x128xbf16>
      %c0_10 = arith.constant 0 : index
      %c0_11 = arith.constant 0 : index
      %c0_12 = arith.constant 0 : index
      %21 = vector.load %arg4[%c0_10, %c0_11, %c0_12] : memref<1x128x128xbf16, #tpu.memory_space<vmem>>, vector<1x128x128xbf16>
      %22 = vector.shape_cast %21 : vector<1x128x128xbf16> to vector<128x128xbf16>
      %cst_13 = arith.constant dense<0.000000e+00> : vector<128x128xf32>
      %23 = tpu.matmul %20, %22, %cst_13 {dimension_numbers = #tpu.dot_dimension_numbers<[1], [0], [0], [1], [0, 0, 1, 1], [], []>} : vector<128x128xbf16>, vector<128x128xbf16>, vector<128x128xf32> -> vector<128x128xf32>
      %24 = arith.truncf %23 : vector<128x128xf32> to vector<128x128xbf16>
      %25 = arith.index_cast %1 : i32 to index
      %c0_14 = arith.constant 0 : index
      %26 = vector.load %arg8[%25, %c0_14] : memref<128x128xbf16, #tpu.memory_space<vmem>>, vector<128x128xbf16>
      tpu.vector_store %arg8[%25, %c0_14], %24 {strides = array<i32>} : memref<128x128xbf16, #tpu.memory_space<vmem>>, vector<128x128xbf16>,
    } else {
    }
    %c2_i32 = arith.constant 2 : i32
    %8 = arith.cmpi eq, %arg0, %c2_i32 : i32
    %9 = arith.extui %8 : i1 to i32
    %c0_i32_2 = arith.constant 0 : i32
    %10 = arith.cmpi ne, %9, %c0_i32_2 : i32
    scf.if %10 {
      %c0 = arith.constant 0 : index
      %c0_3 = arith.constant 0 : index
      %11 = vector.load %arg8[%c0, %c0_3] : memref<128x128xbf16, #tpu.memory_space<vmem>>, vector<128x128xbf16>
      %c0_4 = arith.constant 0 : index
      %c0_5 = arith.constant 0 : index
      %12 = vector.load %arg3[%c0_4, %c0_5] : memref<128x128xbf16, #tpu.memory_space<vmem>>, vector<128x128xbf16>
      %cst = arith.constant dense<0.000000e+00> : vector<128x128xf32>
      %13 = tpu.matmul %12, %11, %cst {dimension_numbers = #tpu.dot_dimension_numbers<[1], [0], [0], [1], [0, 0, 1, 1], [], []>} : vector<128x128xbf16>, vector<128x128xbf16>, vector<128x128xf32> -> vector<128x128xf32>
      %c0_6 = arith.constant 0 : index
      %c0_7 = arith.constant 0 : index
      %c0_8 = arith.constant 0 : index
      %14 = vector.load %arg5[%c0_6, %c0_7, %c0_8] : memref<1x1x128xf32, #tpu.memory_space<vmem>>, vector<1x1x128xf32>
      %15 = vector.shape_cast %14 : vector<1x1x128xf32> to vector<1x128xf32>
      %16 = vector.broadcast %15 : vector<1x128xf32> to vector<128x128xf32>
      %17 = arith.addf %13, %16 : vector<128x128xf32>
      %c0_9 = arith.constant 0 : index
      %c0_10 = arith.constant 0 : index
      %18 = vector.load %arg6[%c0_9, %c0_10] : memref<128x128xf32, #tpu.memory_space<vmem>>, vector<128x128xf32>
      tpu.vector_store %arg6[%c0_9, %c0_10], %17 {strides = array<i32>} : memref<128x128xf32, #tpu.memory_space<vmem>>, vector<128x128xf32>,
    } else {
    }
    return
  }
  func.func @transform_0(%arg0: i32, %arg1: i32) -> (i32, i32) {
    %c0_i32 = arith.constant 0 : i32
    %c0_i32_0 = arith.constant 0 : i32
    %c0_i32_1 = arith.constant 0 : i32
    return %c0_i32, %c0_i32_0 : i32, i32
  }
  func.func @transform_1(%arg0: i32, %arg1: i32) -> (i32, i32) {
    %c0_i32 = arith.constant 0 : i32
    %c0_i32_0 = arith.constant 0 : i32
    return %arg1, %c0_i32 : i32, i32
  }
  func.func @transform_2(%arg0: i32, %arg1: i32) -> (i32, i32, i32) {
    %c1_i32 = arith.constant 1 : i32
    %0 = arith.minsi %arg0, %c1_i32 : i32
    %c0_i32 = arith.constant 0 : i32
    %c0_i32_0 = arith.constant 0 : i32
    %c0_i32_1 = arith.constant 0 : i32
    return %0, %c0_i32, %c0_i32_0 : i32, i32, i32
  }
  func.func @transform_3(%arg0: i32, %arg1: i32) -> (i32, i32, i32) {
    %c0_i32 = arith.constant 0 : i32
    %c0_i32_0 = arith.constant 0 : i32
    %c0_i32_1 = arith.constant 0 : i32
    return %arg0, %c0_i32, %c0_i32_0 : i32, i32, i32
  }
  func.func @transform_4(%arg0: i32, %arg1: i32) -> (i32, i32) {
    %c2_i32 = arith.constant 2 : i32
    %0 = arith.cmpi eq, %arg0, %c2_i32 : i32
    %c0_i32 = arith.constant 0 : i32
    %1 = arith.select %0, %arg1, %c0_i32 : i32
    %c0_i32_0 = arith.constant 0 : i32
    %c0_i32_1 = arith.constant 0 : i32
    return %1, %c0_i32_0 : i32, i32
  }
}

</mosaic_0001>

<llo_original>
// kernel: gcn_forward.1
$region0: #{gcn_forward.1}
  #allocation0 [shape = 'u32[]', space=smem, size = 0x4, offset = 0x4, fixed_abs, tag = 'smem constant byte address 0x4 - core index']
  #allocation1 [shape = 'u32[144,128]{1,0:T(1,128)}', space=vmem, size = 0x12000, scoped, tag = 'internal scratch']
  #allocation2 [shape = 'bf16[128,128]{1,0:T(8,128)(2,1)}', space=vmem, size = 0x8000, scoped, tag = 'scratch operand']
  #allocation3 [shape = 'bf16[128,128]{1,0:T(8,128)(2,1)}', space=vmem, size = 0x8000, scoped, tag = 'scratch operand']
  %s0 = inlined_call_operand.vmem [shape: bf16[128,128], index: 0, kind: input, shape index: {}]
  %s1 = inlined_call_operand.vmem [shape: bf16[128,128], index: 1, kind: input, shape index: {}]
  %s2 = inlined_call_operand.vmem [shape: bf16[2,128,128], index: 2, kind: input, shape index: {}]
  %s3 = inlined_call_operand.vmem [shape: f32[3,1,128], index: 3, kind: input, shape index: {}]
  %s4 = inlined_call_operand.vmem [shape: f32[128,128], index: 4, kind: output, shape index: {}]
  %s5 = sld [smem:[#allocation0]]
  $region61: #{gcn_forward.1} parent=0
    _
  %s7 = ssub.s32 1, %s5
  %s8 = scalar_select 0, %s7, %s5
  loop: start=0, step=1, limit=5
  $region2: #{gcn_forward.1} parent=0 // loop_pre_header
    _
  $region3: #{gcn_forward.1} parent=0 // loop_header
    %s10 = sphi 0, %s14
    %p11 = scmp.ge.s32.totalorder %s10, 5
    %s17 = sphi 0, %s29
    %s18 = sphi 0, %s25
    %s19 = sphi 0, %s17
    %s20 = sphi 0, %s18
    %s21 = sphi 0, %s19
    %s22 = sphi 0, %s20
    %s30 = sphi 0, %s30
    %s32 = sphi 0, %s30
    %s33 = sphi 0, %s32
    %s47 = sphi 0, %s33
    %s53 = sphi 0, %s55
    %s56 = sphi 0, %s53
    %s57 = sphi 0, %s56
    %s73 = sphi 0, %s57
    %s83 = sphi 0, %s85
    %s86 = sphi 0, %s83
    %s87 = sphi 0, %s86
    %s103 = sphi 0, %s87
    %s109 = sphi 0, %s111
    %s112 = sphi 0, %s109
    %s113 = sphi 0, %s112
    %s129 = sphi 0, %s113
    %s139 = sphi 0, %s141
    %s142 = sphi 0, %s139
    %s143 = sphi 0, %s142
    %s159 = sphi 0, %s143
  $region4: #{gcn_forward.1} parent=0 // loop_header_branch
    %13 = sbr.rel (%p11) target = $region8
  $region5: #{gcn_forward.1} parent=0 // loop_body
    %s15 = ssub.s32 %s10, 1
    %s16 = ssub.s32 %s10, 2
    %s23 = sadd.s32 1, %s18
    %p24 = scmp.ge.s32.totalorder %s23, 1
    %s25 = scalar_select %p24, 0, %s23
    %s26 = sadd.s32 1, %s17
    %s27 = scalar_select %p24, %s26, %s17
    %p28 = scmp.ge.s32.totalorder %s27, 3
    %s29 = scalar_select %p28, 0, %s27
    %s31 = sadd.s32 %s30, 1
    %p34 = scmp.eq.s32.totalorder %s10, 2
    %p35 = scmp.ne.s32.totalorder %s30, %s32
    %p36 = scmp.eq.s32.totalorder %s10, 0
    %p37 = por %p35, %p36
    %p38 = scmp.ne.s32.totalorder %s30, %s32
    %p39 = scmp.eq.s32.totalorder %s15, 2
    %p40 = por %p38, %p39
    %p41 = scmp.ne.s32.totalorder %s32, %s33
    %p42 = scmp.eq.s32.totalorder %s15, 0
    %p43 = por %p41, %p42
    %p44 = scmp.ne.s32.totalorder %s32, %s33
    %p45 = scmp.eq.s32.totalorder %s16, 2
    %p46 = por %p44, %p45
    %p48 = scmp.ne.s32.totalorder %s33, %s47
    %p49 = scmp.eq.s32.totalorder %s16, 0
    %p50 = por %p48, %p49
    %s51 = ssub.s32 %s18, %s25
    %p52 = scmp.eq.s32.totalorder %s51, 0
    %s54 = sadd.s32 %s53, 1
    %s55 = scalar_select %p52, %s53, %s54
    %p58 = pneg %p52
    %p59 = scmp.eq.s32.totalorder %s10, 2
    %p60 = por %p58, %p59
    %p61 = scmp.ne.s32.totalorder %s53, %s56
    %p62 = scmp.eq.s32.totalorder %s10, 0
    %p63 = por %p61, %p62
    %p64 = scmp.ne.s32.totalorder %s53, %s56
    %p65 = scmp.eq.s32.totalorder %s15, 2
    %p66 = por %p64, %p65
    %p67 = scmp.ne.s32.totalorder %s56, %s57
    %p68 = scmp.eq.s32.totalorder %s15, 0
    %p69 = por %p67, %p68
    %p70 = scmp.ne.s32.totalorder %s56, %s57
    %p71 = scmp.eq.s32.totalorder %s16, 2
    %p72 = por %p70, %p71
    %p74 = scmp.ne.s32.totalorder %s57, %s73
    %p75 = scmp.eq.s32.totalorder %s16, 0
    %p76 = por %p74, %p75
    %p77 = scmp.lt.s32.totalorder %s17, 1
    %s78 = scalar_select %p77, %s17, 1
    %p79 = scmp.lt.s32.totalorder %s29, 1
    %s80 = scalar_select %p79, %s29, 1
    %s81 = ssub.s32 %s78, %s80
    %p82 = scmp.eq.s32.totalorder %s81, 0
    %s84 = sadd.s32 %s83, 1
    %s85 = scalar_select %p82, %s83, %s84
    %p88 = pneg %p82
    %p89 = scmp.eq.s32.totalorder %s10, 2
    %p90 = por %p88, %p89
    %p91 = scmp.ne.s32.totalorder %s83, %s86
    %p92 = scmp.eq.s32.totalorder %s10, 0
    %p93 = por %p91, %p92
    %p94 = scmp.ne.s32.totalorder %s83, %s86
    %p95 = scmp.eq.s32.totalorder %s15, 2
    %p96 = por %p94, %p95
    %p97 = scmp.ne.s32.totalorder %s86, %s87
    %p98 = scmp.eq.s32.totalorder %s15, 0
    %p99 = por %p97, %p98
    %p100 = scmp.ne.s32.totalorder %s86, %s87
    %p101 = scmp.eq.s32.totalorder %s16, 2
    %p102 = por %p100, %p101
    %p104 = scmp.ne.s32.totalorder %s87, %s103
    %p105 = scmp.eq.s32.totalorder %s16, 0
    %p106 = por %p104, %p105
    %s107 = ssub.s32 %s17, %s29
    %p108 = scmp.eq.s32.totalorder %s107, 0
    %s110 = sadd.s32 %s109, 1
    %s111 = scalar_select %p108, %s109, %s110
    %p114 = pneg %p108
    %p115 = scmp.eq.s32.totalorder %s10, 2
    %p116 = por %p114, %p115
    %p117 = scmp.ne.s32.totalorder %s109, %s112
    %p118 = scmp.eq.s32.totalorder %s10, 0
    %p119 = por %p117, %p118
    %p120 = scmp.ne.s32.totalorder %s109, %s112
    %p121 = scmp.eq.s32.totalorder %s15, 2
    %p122 = por %p120, %p121
    %p123 = scmp.ne.s32.totalorder %s112, %s113
    %p124 = scmp.eq.s32.totalorder %s15, 0
    %p125 = por %p123, %p124
    %p126 = scmp.ne.s32.totalorder %s112, %s113
    %p127 = scmp.eq.s32.totalorder %s16, 2
    %p128 = por %p126, %p127
    %p130 = scmp.ne.s32.totalorder %s113, %s129
    %p131 = scmp.eq.s32.totalorder %s16, 0
    %p132 = por %p130, %p131
    %p133 = scmp.eq.s32.totalorder %s17, 2
    %s134 = scalar_select %p133, %s18, 0
    %p135 = scmp.eq.s32.totalorder %s29, 2
    %s136 = scalar_select %p135, %s25, 0
    %s137 = ssub.s32 %s134, %s136
    %p138 = scmp.eq.s32.totalorder %s137, 0
    %s140 = sadd.s32 %s139, 1
    %s141 = scalar_select %p138, %s139, %s140
    %p144 = pneg %p138
    %p145 = scmp.eq.s32.totalorder %s10, 2
    %p146 = por %p144, %p145
    %p147 = scmp.ne.s32.totalorder %s139, %s142
    %p148 = scmp.eq.s32.totalorder %s10, 0
    %p149 = por %p147, %p148
    %p150 = scmp.ne.s32.totalorder %s139, %s142
    %p151 = scmp.eq.s32.totalorder %s15, 2
    %p152 = por %p150, %p151
    %p153 = scmp.ne.s32.totalorder %s142, %s143
    %p154 = scmp.eq.s32.totalorder %s15, 0
    %p155 = por %p153, %p154
    %p156 = scmp.ne.s32.totalorder %s142, %s143
    %p157 = scmp.eq.s32.totalorder %s16, 2
    %p158 = por %p156, %p157
    %p160 = scmp.ne.s32.totalorder %s143, %s159
    %p161 = scmp.eq.s32.totalorder %s16, 0
    %p162 = por %p160, %p161
    %p163 = scmp.le.s32.totalorder 1, %s10
    %p164 = scmp.lt.s32.totalorder %s10, 4
    %p165 = pnand %p163, %p164
    %p166 = pneg %p165
    // Predicated region
    $region9: #{gcn_forward.1} parent=5 // pred_check
      _
    $region10: #{gcn_forward.1} parent=5 // pred_check_branch
      %168 = sbr.rel (%p165) target = $region12
    $region11: #{gcn_forward.1} parent=5 // pred_region
      %s169 = ssub.s32 %s10, 1
      // Predicated region
      $region13: #{gcn_forward.1} parent=11 // pred_check
        %p170 = pneg %p43
      $region14: #{gcn_forward.1} parent=11 // pred_check_branch
        %172 = sbr.rel (%p170) target = $region16
      $region15: #{gcn_forward.1} parent=11 // pred_region
        _
      $region16: #{gcn_forward.1} parent=11 // pred_fallthru
        _
      // Predicated region
      $region17: #{gcn_forward.1} parent=11 // pred_check
        %p173 = pneg %p69
      $region18: #{gcn_forward.1} parent=11 // pred_check_branch
        %175 = sbr.rel (%p173) target = $region20
      $region19: #{gcn_forward.1} parent=11 // pred_region
        %s176 = smul.u32 16, %s20
        %p177 = scmp.lt.s32.totalorder %s176, 15
        %s178 = scalar_select %p177, %s176, 15
        %s179 = smul.addr %s178, 4
        %s180 = scalar_lea.vmem %s1, %s179
        %s181 = smul.u32 16, %s20
      $region20: #{gcn_forward.1} parent=11 // pred_fallthru
        _
    $region12: #{gcn_forward.1} parent=5 // pred_fallthru
      _
    %p182 = scmp.lt.s32.totalorder %s10, 3
    // Predicated region
    $region21: #{gcn_forward.1} parent=5 // pred_check
      %p183 = pneg %p182
    $region22: #{gcn_forward.1} parent=5 // pred_check_branch
      %185 = sbr.rel (%p183) target = $region24
    $region23: #{gcn_forward.1} parent=5 // pred_region
      // Predicated region
      $region25: #{gcn_forward.1} parent=23 // pred_check
        %p186 = pneg %p93
      $region26: #{gcn_forward.1} parent=23 // pred_check_branch
        %188 = sbr.rel (%p186) target = $region28
      $region27: #{gcn_forward.1} parent=23 // pred_region
        %p189 = scmp.lt.s32.totalorder %s17, 1
        %s190 = scalar_select %p189, %s17, 1
        %p191 = scmp.lt.s32.totalorder %s190, 1
        %s192 = scalar_select %p191, %s190, 1
        %s193 = smul.addr %s192, 16
        %s194 = smul.addr %s193, 4
        %s195 = scalar_lea.vmem %s2, %s194
        %p196 = scmp.lt.s32.totalorder %s17, 1
        %s197 = scalar_select %p196, %s17, 1
      $region28: #{gcn_forward.1} parent=23 // pred_fallthru
        _
      // Predicated region
      $region29: #{gcn_forward.1} parent=23 // pred_check
        %p198 = pneg %p119
      $region30: #{gcn_forward.1} parent=23 // pred_check_branch
        %200 = sbr.rel (%p198) target = $region32
      $region31: #{gcn_forward.1} parent=23 // pred_region
        %p201 = scmp.lt.s32.totalorder %s17, 2
        %s202 = scalar_select %p201, %s17, 2
        %s203 = scalar_lea.vmem %s3, %s202
      $region32: #{gcn_forward.1} parent=23 // pred_fallthru
        _
    $region24: #{gcn_forward.1} parent=5 // pred_fallthru
      _
    %p204 = scmp.le.s32.totalorder 1, %s10
    %p205 = scmp.lt.s32.totalorder %s10, 4
    %p206 = pnand %p204, %p205
    %p207 = pneg %p206
    // Predicated region
    $region33: #{gcn_forward.1} parent=5 // pred_check
      _
    $region34: #{gcn_forward.1} parent=5 // pred_check_branch
      %209 = sbr.rel (%p206) target = $region36
    $region35: #{gcn_forward.1} parent=5 // pred_region
      %s210 = ssub.s32 %s10, 1
      %p211 = pneg %p43
      %p212 = pneg %p40
      %s213 = smul.u32 16, %s20
      %p214 = scmp.lt.s32.totalorder %s213, 15
      %s215 = scalar_select %p214, %s213, 15
      %s216 = smul.addr %s215, 4
      %s217 = scalar_lea.vmem %s1, %s216
      %p218 = pneg %p69
      %p219 = pneg %p66
      %p220 = scmp.lt.s32.totalorder %s19, 1
      %s221 = scalar_select %p220, %s19, 1
      %p222 = scmp.lt.s32.totalorder %s221, 1
      %s223 = scalar_select %p222, %s221, 1
      %s224 = smul.addr %s223, 16
      %s225 = smul.addr %s224, 4
      %s226 = scalar_lea.vmem %s2, %s225
      %p227 = pneg %p99
      %p228 = pneg %p96
      %p229 = scmp.lt.s32.totalorder %s19, 2
      %s230 = scalar_select %p229, %s19, 2
      %s231 = scalar_lea.vmem %s3, %s230
      %p232 = pneg %p125
      %p233 = pneg %p122
      %p234 = pneg %p155
      %p235 = pneg %p152
      %p236 = scmp.eq.s32.totalorder %s19, 2
      %s237 = scalar_select %p236, %s20, 0
      %s238 = smul.u32 16, %s237
      %p239 = scmp.lt.s32.totalorder %s238, 15
      %s240 = scalar_select %p239, %s238, 15
      %s241 = smul.addr %s240, 8
      %s242 = scalar_lea.vmem %s4, %s241
      %s243 = smul.u32 16, %s20
      %p244 = scmp.lt.s32.totalorder %s243, 15
      %s245 = scalar_select %p244, %s243, 15
      %s246 = smul.addr %s245, 4
      %s247 = scalar_lea.vmem %s1, %s246
      %s248 = smul.u32 16, %s20
      %p249 = scmp.lt.s32.totalorder %s19, 1
      %s250 = scalar_select %p249, %s19, 1
      %p251 = scmp.lt.s32.totalorder %s250, 1
      %s252 = scalar_select %p251, %s250, 1
      %s253 = smul.addr %s252, 16
      %s254 = smul.addr %s253, 4
      %s255 = scalar_lea.vmem %s2, %s254
      %p256 = scmp.lt.s32.totalorder %s19, 1
      %s257 = scalar_select %p256, %s19, 1
      %p258 = scmp.lt.s32.totalorder %s19, 2
      %s259 = scalar_select %p258, %s19, 2
      %s260 = scalar_lea.vmem %s3, %s259
      %p261 = scmp.eq.s32.totalorder %s19, 2
      %s262 = scalar_select %p261, %s20, 0
      %s263 = smul.u32 16, %s262
      %p264 = scmp.lt.s32.totalorder %s263, 15
      %s265 = scalar_select %p264, %s263, 15
      %s266 = smul.addr %s265, 8
      %s267 = scalar_lea.vmem %s4, %s266
      %p268 = scmp.eq.s32.totalorder %s19, 2
      %s269 = scalar_select %p268, %s20, 0
      %s270 = smul.u32 16, %s269
      %s272 = smul.u32 %s20, 128
      %p273 = scmp.eq.s32.totalorder %s19, 0
      // Predicated region
      $region37: #{gcn_forward.1} parent=35 // pred_check
        %p274 = pneg %p273
      $region38: #{gcn_forward.1} parent=35 // pred_check_branch
        %276 = sbr.rel (%p274) target = $region40
      $region39: #{gcn_forward.1} parent=35 // pred_region
        %v277 = vld [vmem:[%s0] sm:$0xf]
        %v278 = vld [vmem:[%s0 + $0x4] sm:$0xf]
        %v279 = vld [vmem:[%s0 + $0x8] sm:$0xf]
        %v280 = vld [vmem:[%s0 + $0xc] sm:$0xf]
        %v281 = vld [vmem:[%s0 + $0x10] sm:$0xf]
        %v282 = vld [vmem:[%s0 + $0x14] sm:$0xf]
        %v283 = vld [vmem:[%s0 + $0x18] sm:$0xf]
        %v284 = vld [vmem:[%s0 + $0x1c] sm:$0xf]
        %v285 = vld [vmem:[%s0 + $0x20] sm:$0xf]
        %v286 = vld [vmem:[%s0 + $0x24] sm:$0xf]
        %v287 = vld [vmem:[%s0 + $0x28] sm:$0xf]
        %v288 = vld [vmem:[%s0 + $0x2c] sm:$0xf]
        %v289 = vld [vmem:[%s0 + $0x30] sm:$0xf]
        %v290 = vld [vmem:[%s0 + $0x34] sm:$0xf]
        %v291 = vld [vmem:[%s0 + $0x38] sm:$0xf]
        %v292 = vld [vmem:[%s0 + $0x3c] sm:$0xf]
        %v293 = vld [vmem:[%s247] sm:$0xf]
        %v294 = vld [vmem:[%s247 + $0x4] sm:$0xf]
        %v295 = vld [vmem:[%s247 + $0x8] sm:$0xf]
        %v296 = vld [vmem:[%s247 + $0xc] sm:$0xf]
        %v297 = vld [vmem:[%s247 + $0x10] sm:$0xf]
        %v298 = vld [vmem:[%s247 + $0x14] sm:$0xf]
        %v299 = vld [vmem:[%s247 + $0x18] sm:$0xf]
        %v300 = vld [vmem:[%s247 + $0x1c] sm:$0xf]
        %v301 = vld [vmem:[%s247 + $0x20] sm:$0xf]
        %v302 = vld [vmem:[%s247 + $0x24] sm:$0xf]
        %v303 = vld [vmem:[%s247 + $0x28] sm:$0xf]
        %v304 = vld [vmem:[%s247 + $0x2c] sm:$0xf]
        %v305 = vld [vmem:[%s247 + $0x30] sm:$0xf]
        %v306 = vld [vmem:[%s247 + $0x34] sm:$0xf]
        %v307 = vld [vmem:[%s247 + $0x38] sm:$0xf]
        %v308 = vld [vmem:[%s247 + $0x3c] sm:$0xf]
        %v309 = vld [vmem:[%s260] sm:$0x1]
        %v311 = vlaneseq
        %v312 = vshrl.u32 %v311, 7
        %v313 = vsub.s32 0, %v312
        %v314 = vrot.slane %v309, %v313
        %v332 = vunpack.c.l.b16 %v293
        %v333 = vunpack.c.l.b16 %v294
        %v334 = vunpack.c.l.b16 %v295
        %v335 = vunpack.c.l.b16 %v296
        %v336 = vunpack.c.l.b16 %v297
        %v337 = vunpack.c.l.b16 %v298
        %v338 = vunpack.c.l.b16 %v299
        %v339 = vunpack.c.l.b16 %v300
        %v340 = vunpack.c.l.b16 %v301
        %v341 = vunpack.c.l.b16 %v302
        %v342 = vunpack.c.l.b16 %v303
        %v343 = vunpack.c.l.b16 %v304
        %v344 = vunpack.c.l.b16 %v305
        %v345 = vunpack.c.l.b16 %v306
        %v346 = vunpack.c.l.b16 %v307
        %v347 = vunpack.c.l.b16 %v308
        %v348 = vpack.c.b16 %v333, %v332
        %v349 = vpack.c.b16 %v335, %v334
        %v350 = vpack.c.b16 %v337, %v336
        %v351 = vpack.c.b16 %v339, %v338
        %v352 = vpack.c.b16 %v341, %v340
        %v353 = vpack.c.b16 %v343, %v342
        %v354 = vpack.c.b16 %v345, %v344
        %v355 = vpack.c.b16 %v347, %v346
        %v380 = vunpack.c.l.b16 %v277
        %v381 = vunpack.c.l.b16 %v278
        %v382 = vunpack.c.l.b16 %v279
        %v383 = vunpack.c.l.b16 %v280
        %v384 = vunpack.c.l.b16 %v281
        %v385 = vunpack.c.l.b16 %v282
        %v386 = vunpack.c.l.b16 %v283
        %v387 = vunpack.c.l.b16 %v284
        %v388 = vunpack.c.l.b16 %v285
        %v389 = vunpack.c.l.b16 %v286
        %v390 = vunpack.c.l.b16 %v287
        %v391 = vunpack.c.l.b16 %v288
        %v392 = vunpack.c.l.b16 %v289
        %v393 = vunpack.c.l.b16 %v290
        %v394 = vunpack.c.l.b16 %v291
        %v395 = vunpack.c.l.b16 %v292
        %v396 = vpack.c.b16 %v381, %v380
        %v397 = vpack.c.b16 %v383, %v382
        %v398 = vpack.c.b16 %v385, %v384
        %v399 = vpack.c.b16 %v387, %v386
        %v400 = vpack.c.b16 %v389, %v388
        %v401 = vpack.c.b16 %v391, %v390
        %v402 = vpack.c.b16 %v393, %v392
        %v403 = vpack.c.b16 %v395, %v394
        %412 = vmatprep.subr.bf16.mxu0 0
        %413 = vmatpush1.bf16.msra.mxu0 %v403
        %414 = vmatprep.subr.bf16.mxu0 0
        %415 = vmatpush1.bf16.msra.mxu0 %v402
        %416 = vmatprep.subr.bf16.mxu0 0
        %417 = vmatpush1.bf16.msra.mxu0 %v401
        %418 = vmatprep.subr.bf16.mxu0 0
        %419 = vmatpush1.bf16.msra.mxu0 %v400
        %420 = vmatprep.subr.bf16.mxu0 0
        %421 = vmatpush1.bf16.msra.mxu0 %v399
        %422 = vmatprep.subr.bf16.mxu0 0
        %423 = vmatpush1.bf16.msra.mxu0 %v398
        %424 = vmatprep.subr.bf16.mxu0 0
        %425 = vmatpush1.bf16.msra.mxu0 %v397
        %426 = vmatprep.subr.bf16.mxu0 0
        %427 = vmatpush1.bf16.msra.mxu0 %v396
        %428 = vmatprep.subr.bf16.mxu0 0
        %429 = vmatpush2.bf16.msra.mxu0 0
        %430 = vmatprep.subr.bf16.mxu0 0
        %431 = vmatpush2.bf16.msra.mxu0 0
        %432 = vmatprep.subr.bf16.mxu0 0
        %433 = vmatpush2.bf16.msra.mxu0 0
        %434 = vmatprep.subr.bf16.mxu0 0
        %435 = vmatpush2.bf16.msra.mxu0 0
        %436 = vmatprep.subr.bf16.mxu0 0
        %437 = vmatpush2.bf16.msra.mxu0 0
        %438 = vmatprep.subr.bf16.mxu0 0
        %439 = vmatpush2.bf16.msra.mxu0 0
        %440 = vmatprep.subr.bf16.mxu0 0
        %441 = vmatpush2.bf16.msra.mxu0 0
        %442 = vmatprep.subr.bf16.mxu0 0
        %443 = vmatpush2.bf16.msra.mxu0 0
        %444 = vmatprep.mubr.bf16.mxu0 0
        %445 = vmatmul.mubr.bf16.gmra.mxu0 %v348
        %v446 = vpop.f32.mrf.mxu0
        %v447 = vadd.f32 %v314, %v446
        %v448 = vpop.f32.mrf.mxu0
        %v449 = vpop.f32.mrf.mxu0
        %v450 = vadd.f32 %v314, %v449
        %v451 = vpop.f32.mrf.mxu0
        %452 = vmatprep.mubr.bf16.mxu0 0
        %453 = vmatmul.mubr.bf16.gmra.mxu0 %v349
        %v454 = vpop.f32.mrf.mxu0
        %v455 = vadd.f32 %v314, %v454
        %v456 = vpop.f32.mrf.mxu0
        %v457 = vpop.f32.mrf.mxu0
        %v458 = vadd.f32 %v314, %v457
        %v459 = vpop.f32.mrf.mxu0
        %460 = vmatprep.mubr.bf16.mxu0 0
        %461 = vmatmul.mubr.bf16.gmra.mxu0 %v350
        %v462 = vpop.f32.mrf.mxu0
        %v463 = vadd.f32 %v314, %v462
        %v464 = vpop.f32.mrf.mxu0
        %v465 = vpop.f32.mrf.mxu0
        %v466 = vadd.f32 %v314, %v465
        %v467 = vpop.f32.mrf.mxu0
        %468 = vmatprep.mubr.bf16.mxu0 0
        %469 = vmatmul.mubr.bf16.gmra.mxu0 %v351
        %v470 = vpop.f32.mrf.mxu0
        %v471 = vadd.f32 %v314, %v470
        %v472 = vpop.f32.mrf.mxu0
        %v473 = vpop.f32.mrf.mxu0
        %v474 = vadd.f32 %v314, %v473
        %v475 = vpop.f32.mrf.mxu0
        %476 = vmatprep.mubr.bf16.mxu0 0
        %477 = vmatmul.mubr.bf16.gmra.mxu0 %v352
        %v478 = vpop.f32.mrf.mxu0
        %v479 = vadd.f32 %v314, %v478
        %v480 = vpop.f32.mrf.mxu0
        %v481 = vpop.f32.mrf.mxu0
        %v482 = vadd.f32 %v314, %v481
        %v483 = vpop.f32.mrf.mxu0
        %484 = vmatprep.mubr.bf16.mxu0 0
        %485 = vmatmul.mubr.bf16.gmra.mxu0 %v353
        %v486 = vpop.f32.mrf.mxu0
        %v487 = vadd.f32 %v314, %v486
        %v488 = vpop.f32.mrf.mxu0
        %v489 = vpop.f32.mrf.mxu0
        %v490 = vadd.f32 %v314, %v489
        %v491 = vpop.f32.mrf.mxu0
        %492 = vmatprep.mubr.bf16.mxu0 0
        %493 = vmatmul.mubr.bf16.gmra.mxu0 %v354
        %v494 = vpop.f32.mrf.mxu0
        %v495 = vadd.f32 %v314, %v494
        %v496 = vpop.f32.mrf.mxu0
        %v497 = vpop.f32.mrf.mxu0
        %v498 = vadd.f32 %v314, %v497
        %v499 = vpop.f32.mrf.mxu0
        %500 = vmatprep.mubr.bf16.mxu0 0
        %501 = vmatmul.mubr.bf16.gmra.mxu0 %v355
        %v502 = vpop.f32.mrf.mxu0
        %v503 = vadd.f32 %v314, %v502
        %v504 = vpop.f32.mrf.mxu0
        %v505 = vpop.f32.mrf.mxu0
        %v506 = vadd.f32 %v314, %v505
        %v507 = vpop.f32.mrf.mxu0
        %508 = vdwg.mxu0
        %v509 = vmax.f32 %v447, 0.0
        %v510 = vmax.f32 %v450, 0.0
        %v511 = vmax.f32 %v455, 0.0
        %v512 = vmax.f32 %v458, 0.0
        %v513 = vmax.f32 %v463, 0.0
        %v514 = vmax.f32 %v466, 0.0
        %v515 = vmax.f32 %v471, 0.0
        %v516 = vmax.f32 %v474, 0.0
        %v517 = vmax.f32 %v479, 0.0
        %v518 = vmax.f32 %v482, 0.0
        %v519 = vmax.f32 %v487, 0.0
        %v520 = vmax.f32 %v490, 0.0
        %v521 = vmax.f32 %v495, 0.0
        %v522 = vmax.f32 %v498, 0.0
        %v523 = vmax.f32 %v503, 0.0
        %v524 = vmax.f32 %v506, 0.0
        %v525 = vpack.c.bf16 %v510, %v509
        %v526 = vpack.c.bf16 %v512, %v511
        %v527 = vpack.c.bf16 %v514, %v513
        %v528 = vpack.c.bf16 %v516, %v515
        %v529 = vpack.c.bf16 %v518, %v517
        %v530 = vpack.c.bf16 %v520, %v519
        %v531 = vpack.c.bf16 %v522, %v521
        %v532 = vpack.c.bf16 %v524, %v523
        %v533 = vld [vmem:[%s255] sm:$0xf]
        %v534 = vld [vmem:[%s255 + $0x4] sm:$0xf]
        %v535 = vld [vmem:[%s255 + $0x8] sm:$0xf]
        %v536 = vld [vmem:[%s255 + $0xc] sm:$0xf]
        %v537 = vld [vmem:[%s255 + $0x10] sm:$0xf]
        %v538 = vld [vmem:[%s255 + $0x14] sm:$0xf]
        %v539 = vld [vmem:[%s255 + $0x18] sm:$0xf]
        %v540 = vld [vmem:[%s255 + $0x1c] sm:$0xf]
        %v541 = vld [vmem:[%s255 + $0x20] sm:$0xf]
        %v542 = vld [vmem:[%s255 + $0x24] sm:$0xf]
        %v543 = vld [vmem:[%s255 + $0x28] sm:$0xf]
        %v544 = vld [vmem:[%s255 + $0x2c] sm:$0xf]
        %v545 = vld [vmem:[%s255 + $0x30] sm:$0xf]
        %v546 = vld [vmem:[%s255 + $0x34] sm:$0xf]
        %v547 = vld [vmem:[%s255 + $0x38] sm:$0xf]
        %v548 = vld [vmem:[%s255 + $0x3c] sm:$0xf]
        %v565 = vunpack.c.l.b16 %v533
        %v566 = vunpack.c.l.b16 %v534
        %v567 = vunpack.c.l.b16 %v535
        %v568 = vunpack.c.l.b16 %v536
        %v569 = vunpack.c.l.b16 %v537
        %v570 = vunpack.c.l.b16 %v538
        %v571 = vunpack.c.l.b16 %v539
        %v572 = vunpack.c.l.b16 %v540
        %v573 = vunpack.c.l.b16 %v541
        %v574 = vunpack.c.l.b16 %v542
        %v575 = vunpack.c.l.b16 %v543
        %v576 = vunpack.c.l.b16 %v544
        %v577 = vunpack.c.l.b16 %v545
        %v578 = vunpack.c.l.b16 %v546
        %v579 = vunpack.c.l.b16 %v547
        %v580 = vunpack.c.l.b16 %v548
        %v581 = vpack.c.b16 %v566, %v565
        %v582 = vpack.c.b16 %v568, %v567
        %v583 = vpack.c.b16 %v570, %v569
        %v584 = vpack.c.b16 %v572, %v571
        %v585 = vpack.c.b16 %v574, %v573
        %v586 = vpack.c.b16 %v576, %v575
        %v587 = vpack.c.b16 %v578, %v577
        %v588 = vpack.c.b16 %v580, %v579
        %597 = vmatprep.subr.bf16.mxu0 0
        %598 = vmatpush1.bf16.msra.mxu0 %v588
        %599 = vmatprep.subr.bf16.mxu0 0
        %600 = vmatpush1.bf16.msra.mxu0 %v587
        %601 = vmatprep.subr.bf16.mxu0 0
        %602 = vmatpush1.bf16.msra.mxu0 %v586
        %603 = vmatprep.subr.bf16.mxu0 0
        %604 = vmatpush1.bf16.msra.mxu0 %v585
        %605 = vmatprep.subr.bf16.mxu0 0
        %606 = vmatpush1.bf16.msra.mxu0 %v584
        %607 = vmatprep.subr.bf16.mxu0 0
        %608 = vmatpush1.bf16.msra.mxu0 %v583
        %609 = vmatprep.subr.bf16.mxu0 0
        %610 = vmatpush1.bf16.msra.mxu0 %v582
        %611 = vmatprep.subr.bf16.mxu0 0
        %612 = vmatpush1.bf16.msra.mxu0 %v581
        %613 = vmatprep.subr.bf16.mxu0 0
        %614 = vmatpush2.bf16.msra.mxu0 0
        %615 = vmatprep.subr.bf16.mxu0 0
        %616 = vmatpush2.bf16.msra.mxu0 0
        %617 = vmatprep.subr.bf16.mxu0 0
        %618 = vmatpush2.bf16.msra.mxu0 0
        %619 = vmatprep.subr.bf16.mxu0 0
        %620 = vmatpush2.bf16.msra.mxu0 0
        %621 = vmatprep.subr.bf16.mxu0 0
        %622 = vmatpush2.bf16.msra.mxu0 0
        %623 = vmatprep.subr.bf16.mxu0 0
        %624 = vmatpush2.bf16.msra.mxu0 0
        %625 = vmatprep.subr.bf16.mxu0 0
        %626 = vmatpush2.bf16.msra.mxu0 0
        %627 = vmatprep.subr.bf16.mxu0 0
        %628 = vmatpush2.bf16.msra.mxu0 0
        %629 = vmatprep.mubr.bf16.mxu0 0
        %630 = vmatmul.mubr.bf16.gmra.mxu0 %v525
        %v631 = vpop.f32.mrf.mxu0
        %v632 = vadd.f32 0.0, %v631
        %v633 = vpop.f32.mrf.mxu0
        %v634 = vpop.f32.mrf.mxu0
        %v635 = vadd.f32 0.0, %v634
        %v636 = vpop.f32.mrf.mxu0
        %637 = vmatprep.mubr.bf16.mxu0 0
        %638 = vmatmul.mubr.bf16.gmra.mxu0 %v526
        %v639 = vpop.f32.mrf.mxu0
        %v640 = vadd.f32 0.0, %v639
        %v641 = vpop.f32.mrf.mxu0
        %v642 = vpop.f32.mrf.mxu0
        %v643 = vadd.f32 0.0, %v642
        %v644 = vpop.f32.mrf.mxu0
        %645 = vmatprep.mubr.bf16.mxu0 0
        %646 = vmatmul.mubr.bf16.gmra.mxu0 %v527
        %v647 = vpop.f32.mrf.mxu0
        %v648 = vadd.f32 0.0, %v647
        %v649 = vpop.f32.mrf.mxu0
        %v650 = vpop.f32.mrf.mxu0
        %v651 = vadd.f32 0.0, %v650
        %v652 = vpop.f32.mrf.mxu0
        %653 = vmatprep.mubr.bf16.mxu0 0
        %654 = vmatmul.mubr.bf16.gmra.mxu0 %v528
        %v655 = vpop.f32.mrf.mxu0
        %v656 = vadd.f32 0.0, %v655
        %v657 = vpop.f32.mrf.mxu0
        %v658 = vpop.f32.mrf.mxu0
        %v659 = vadd.f32 0.0, %v658
        %v660 = vpop.f32.mrf.mxu0
        %661 = vmatprep.mubr.bf16.mxu0 0
        %662 = vmatmul.mubr.bf16.gmra.mxu0 %v529
        %v663 = vpop.f32.mrf.mxu0
        %v664 = vadd.f32 0.0, %v663
        %v665 = vpop.f32.mrf.mxu0
        %v666 = vpop.f32.mrf.mxu0
        %v667 = vadd.f32 0.0, %v666
        %v668 = vpop.f32.mrf.mxu0
        %669 = vmatprep.mubr.bf16.mxu0 0
        %670 = vmatmul.mubr.bf16.gmra.mxu0 %v530
        %v671 = vpop.f32.mrf.mxu0
        %v672 = vadd.f32 0.0, %v671
        %v673 = vpop.f32.mrf.mxu0
        %v674 = vpop.f32.mrf.mxu0
        %v675 = vadd.f32 0.0, %v674
        %v676 = vpop.f32.mrf.mxu0
        %677 = vmatprep.mubr.bf16.mxu0 0
        %678 = vmatmul.mubr.bf16.gmra.mxu0 %v531
        %v679 = vpop.f32.mrf.mxu0
        %v680 = vadd.f32 0.0, %v679
        %v681 = vpop.f32.mrf.mxu0
        %v682 = vpop.f32.mrf.mxu0
        %v683 = vadd.f32 0.0, %v682
        %v684 = vpop.f32.mrf.mxu0
        %685 = vmatprep.mubr.bf16.mxu0 0
        %686 = vmatmul.mubr.bf16.gmra.mxu0 %v532
        %v687 = vpop.f32.mrf.mxu0
        %v688 = vadd.f32 0.0, %v687
        %v689 = vpop.f32.mrf.mxu0
        %v690 = vpop.f32.mrf.mxu0
        %v691 = vadd.f32 0.0, %v690
        %v692 = vpop.f32.mrf.mxu0
        %693 = vdwg.mxu0
        %v694 = vpack.c.bf16 %v635, %v632
        %v695 = vpack.c.bf16 %v643, %v640
        %v696 = vpack.c.bf16 %v651, %v648
        %v697 = vpack.c.bf16 %v659, %v656
        %v698 = vpack.c.bf16 %v667, %v664
        %v699 = vpack.c.bf16 %v675, %v672
        %v700 = vpack.c.bf16 %v683, %v680
        %v701 = vpack.c.bf16 %v691, %v688
        %v710 = vunpack.c.l.b16 %v694
        %v711 = vunpack.c.h.b16 %v694
        %v712 = vunpack.c.l.b16 %v695
        %v713 = vunpack.c.h.b16 %v695
        %v714 = vunpack.c.l.b16 %v696
        %v715 = vunpack.c.h.b16 %v696
        %v716 = vunpack.c.l.b16 %v697
        %v717 = vunpack.c.h.b16 %v697
        %v718 = vunpack.c.l.b16 %v698
        %v719 = vunpack.c.h.b16 %v698
        %v720 = vunpack.c.l.b16 %v699
        %v721 = vunpack.c.h.b16 %v699
        %v722 = vunpack.c.l.b16 %v700
        %v723 = vunpack.c.h.b16 %v700
        %v724 = vunpack.c.l.b16 %v701
        %v725 = vunpack.c.h.b16 %v701
        %v726 = vpack.c.b16 %v710, %v710
        %v727 = vpack.c.b16 %v711, %v711
        %v728 = vpack.c.b16 %v712, %v712
        %v729 = vpack.c.b16 %v713, %v713
        %v730 = vpack.c.b16 %v714, %v714
        %v731 = vpack.c.b16 %v715, %v715
        %v732 = vpack.c.b16 %v716, %v716
        %v733 = vpack.c.b16 %v717, %v717
        %v734 = vpack.c.b16 %v718, %v718
        %v735 = vpack.c.b16 %v719, %v719
        %v736 = vpack.c.b16 %v720, %v720
        %v737 = vpack.c.b16 %v721, %v721
        %v738 = vpack.c.b16 %v722, %v722
        %v739 = vpack.c.b16 %v723, %v723
        %v740 = vpack.c.b16 %v724, %v724
        %v741 = vpack.c.b16 %v725, %v725
        %s758 = sshra.s32 %s272, 3
        %s759 = sand.u32 %s272, 7
        %s760 = smul.addr %s758, 4
        %s761 = scalar_lea.vmem [#allocation2], %s760
        %762 = vst [vmem:[%s761] sm:$0xf] %v726
        %763 = vst [vmem:[%s761 + $0x4] sm:$0xf] %v727
        %764 = vst [vmem:[%s761 + $0x8] sm:$0xf] %v728
        %765 = vst [vmem:[%s761 + $0xc] sm:$0xf] %v729
        %766 = vst [vmem:[%s761 + $0x10] sm:$0xf] %v730
        %767 = vst [vmem:[%s761 + $0x14] sm:$0xf] %v731
        %768 = vst [vmem:[%s761 + $0x18] sm:$0xf] %v732
        %769 = vst [vmem:[%s761 + $0x1c] sm:$0xf] %v733
        %770 = vst [vmem:[%s761 + $0x20] sm:$0xf] %v734
        %771 = vst [vmem:[%s761 + $0x24] sm:$0xf] %v735
        %772 = vst [vmem:[%s761 + $0x28] sm:$0xf] %v736
        %773 = vst [vmem:[%s761 + $0x2c] sm:$0xf] %v737
        %774 = vst [vmem:[%s761 + $0x30] sm:$0xf] %v738
        %775 = vst [vmem:[%s761 + $0x34] sm:$0xf] %v739
        %776 = vst [vmem:[%s761 + $0x38] sm:$0xf] %v740
        %777 = vst [vmem:[%s761 + $0x3c] sm:$0xf] %v741
      $region40: #{gcn_forward.1} parent=35 // pred_fallthru
        _
      %p778 = scmp.eq.s32.totalorder %s19, 1
      // Predicated region
      $region41: #{gcn_forward.1} parent=35 // pred_check
        %p779 = pneg %p778
      $region42: #{gcn_forward.1} parent=35 // pred_check_branch
        %781 = sbr.rel (%p779) target = $region44
      $region43: #{gcn_forward.1} parent=35 // pred_region
        %v782 = vld [vmem:[#allocation2] sm:$0xf]
        %v783 = vld [vmem:[#allocation2 + $0x4] sm:$0xf]
        %v784 = vld [vmem:[#allocation2 + $0x8] sm:$0xf]
        %v785 = vld [vmem:[#allocation2 + $0xc] sm:$0xf]
        %v786 = vld [vmem:[#allocation2 + $0x10] sm:$0xf]
        %v787 = vld [vmem:[#allocation2 + $0x14] sm:$0xf]
        %v788 = vld [vmem:[#allocation2 + $0x18] sm:$0xf]
        %v789 = vld [vmem:[#allocation2 + $0x1c] sm:$0xf]
        %v790 = vld [vmem:[#allocation2 + $0x20] sm:$0xf]
        %v791 = vld [vmem:[#allocation2 + $0x24] sm:$0xf]
        %v792 = vld [vmem:[#allocation2 + $0x28] sm:$0xf]
        %v793 = vld [vmem:[#allocation2 + $0x2c] sm:$0xf]
        %v794 = vld [vmem:[#allocation2 + $0x30] sm:$0xf]
        %v795 = vld [vmem:[#allocation2 + $0x34] sm:$0xf]
        %v796 = vld [vmem:[#allocation2 + $0x38] sm:$0xf]
        %v797 = vld [vmem:[#allocation2 + $0x3c] sm:$0xf]
        %v798 = vld [vmem:[%s247] sm:$0xf]
        %v799 = vld [vmem:[%s247 + $0x4] sm:$0xf]
        %v800 = vld [vmem:[%s247 + $0x8] sm:$0xf]
        %v801 = vld [vmem:[%s247 + $0xc] sm:$0xf]
        %v802 = vld [vmem:[%s247 + $0x10] sm:$0xf]
        %v803 = vld [vmem:[%s247 + $0x14] sm:$0xf]
        %v804 = vld [vmem:[%s247 + $0x18] sm:$0xf]
        %v805 = vld [vmem:[%s247 + $0x1c] sm:$0xf]
        %v806 = vld [vmem:[%s247 + $0x20] sm:$0xf]
        %v807 = vld [vmem:[%s247 + $0x24] sm:$0xf]
        %v808 = vld [vmem:[%s247 + $0x28] sm:$0xf]
        %v809 = vld [vmem:[%s247 + $0x2c] sm:$0xf]
        %v810 = vld [vmem:[%s247 + $0x30] sm:$0xf]
        %v811 = vld [vmem:[%s247 + $0x34] sm:$0xf]
        %v812 = vld [vmem:[%s247 + $0x38] sm:$0xf]
        %v813 = vld [vmem:[%s247 + $0x3c] sm:$0xf]
        %v814 = vld [vmem:[%s260] sm:$0x1]
        %v816 = vlaneseq
        %v817 = vshrl.u32 %v816, 7
        %v818 = vsub.s32 0, %v817
        %v819 = vrot.slane %v814, %v818
        %v837 = vunpack.c.l.b16 %v798
        %v838 = vunpack.c.l.b16 %v799
        %v839 = vunpack.c.l.b16 %v800
        %v840 = vunpack.c.l.b16 %v801
        %v841 = vunpack.c.l.b16 %v802
        %v842 = vunpack.c.l.b16 %v803
        %v843 = vunpack.c.l.b16 %v804
        %v844 = vunpack.c.l.b16 %v805
        %v845 = vunpack.c.l.b16 %v806
        %v846 = vunpack.c.l.b16 %v807
        %v847 = vunpack.c.l.b16 %v808
        %v848 = vunpack.c.l.b16 %v809
        %v849 = vunpack.c.l.b16 %v810
        %v850 = vunpack.c.l.b16 %v811
        %v851 = vunpack.c.l.b16 %v812
        %v852 = vunpack.c.l.b16 %v813
        %v853 = vpack.c.b16 %v838, %v837
        %v854 = vpack.c.b16 %v840, %v839
        %v855 = vpack.c.b16 %v842, %v841
        %v856 = vpack.c.b16 %v844, %v843
        %v857 = vpack.c.b16 %v846, %v845
        %v858 = vpack.c.b16 %v848, %v847
        %v859 = vpack.c.b16 %v850, %v849
        %v860 = vpack.c.b16 %v852, %v851
        %v885 = vunpack.c.l.b16 %v782
        %v886 = vunpack.c.l.b16 %v783
        %v887 = vunpack.c.l.b16 %v784
        %v888 = vunpack.c.l.b16 %v785
        %v889 = vunpack.c.l.b16 %v786
        %v890 = vunpack.c.l.b16 %v787
        %v891 = vunpack.c.l.b16 %v788
        %v892 = vunpack.c.l.b16 %v789
        %v893 = vunpack.c.l.b16 %v790
        %v894 = vunpack.c.l.b16 %v791
        %v895 = vunpack.c.l.b16 %v792
        %v896 = vunpack.c.l.b16 %v793
        %v897 = vunpack.c.l.b16 %v794
        %v898 = vunpack.c.l.b16 %v795
        %v899 = vunpack.c.l.b16 %v796
        %v900 = vunpack.c.l.b16 %v797
        %v901 = vpack.c.b16 %v886, %v885
        %v902 = vpack.c.b16 %v888, %v887
        %v903 = vpack.c.b16 %v890, %v889
        %v904 = vpack.c.b16 %v892, %v891
        %v905 = vpack.c.b16 %v894, %v893
        %v906 = vpack.c.b16 %v896, %v895
        %v907 = vpack.c.b16 %v898, %v897
        %v908 = vpack.c.b16 %v900, %v899
        %917 = vmatprep.subr.bf16.mxu0 0
        %918 = vmatpush1.bf16.msra.mxu0 %v908
        %919 = vmatprep.subr.bf16.mxu0 0
        %920 = vmatpush1.bf16.msra.mxu0 %v907
        %921 = vmatprep.subr.bf16.mxu0 0
        %922 = vmatpush1.bf16.msra.mxu0 %v906
        %923 = vmatprep.subr.bf16.mxu0 0
        %924 = vmatpush1.bf16.msra.mxu0 %v905
        %925 = vmatprep.subr.bf16.mxu0 0
        %926 = vmatpush1.bf16.msra.mxu0 %v904
        %927 = vmatprep.subr.bf16.mxu0 0
        %928 = vmatpush1.bf16.msra.mxu0 %v903
        %929 = vmatprep.subr.bf16.mxu0 0
        %930 = vmatpush1.bf16.msra.mxu0 %v902
        %931 = vmatprep.subr.bf16.mxu0 0
        %932 = vmatpush1.bf16.msra.mxu0 %v901
        %933 = vmatprep.subr.bf16.mxu0 0
        %934 = vmatpush2.bf16.msra.mxu0 0
        %935 = vmatprep.subr.bf16.mxu0 0
        %936 = vmatpush2.bf16.msra.mxu0 0
        %937 = vmatprep.subr.bf16.mxu0 0
        %938 = vmatpush2.bf16.msra.mxu0 0
        %939 = vmatprep.subr.bf16.mxu0 0
        %940 = vmatpush2.bf16.msra.mxu0 0
        %941 = vmatprep.subr.bf16.mxu0 0
        %942 = vmatpush2.bf16.msra.mxu0 0
        %943 = vmatprep.subr.bf16.mxu0 0
        %944 = vmatpush2.bf16.msra.mxu0 0
        %945 = vmatprep.subr.bf16.mxu0 0
        %946 = vmatpush2.bf16.msra.mxu0 0
        %947 = vmatprep.subr.bf16.mxu0 0
        %948 = vmatpush2.bf16.msra.mxu0 0
        %949 = vmatprep.mubr.bf16.mxu0 0
        %950 = vmatmul.mubr.bf16.gmra.mxu0 %v853
        %v951 = vpop.f32.mrf.mxu0
        %v952 = vadd.f32 %v819, %v951
        %v953 = vpop.f32.mrf.mxu0
        %v954 = vpop.f32.mrf.mxu0
        %v955 = vadd.f32 %v819, %v954
        %v956 = vpop.f32.mrf.mxu0
        %957 = vmatprep.mubr.bf16.mxu0 0
        %958 = vmatmul.mubr.bf16.gmra.mxu0 %v854
        %v959 = vpop.f32.mrf.mxu0
        %v960 = vadd.f32 %v819, %v959
        %v961 = vpop.f32.mrf.mxu0
        %v962 = vpop.f32.mrf.mxu0
        %v963 = vadd.f32 %v819, %v962
        %v964 = vpop.f32.mrf.mxu0
        %965 = vmatprep.mubr.bf16.mxu0 0
        %966 = vmatmul.mubr.bf16.gmra.mxu0 %v855
        %v967 = vpop.f32.mrf.mxu0
        %v968 = vadd.f32 %v819, %v967
        %v969 = vpop.f32.mrf.mxu0
        %v970 = vpop.f32.mrf.mxu0
        %v971 = vadd.f32 %v819, %v970
        %v972 = vpop.f32.mrf.mxu0
        %973 = vmatprep.mubr.bf16.mxu0 0
        %974 = vmatmul.mubr.bf16.gmra.mxu0 %v856
        %v975 = vpop.f32.mrf.mxu0
        %v976 = vadd.f32 %v819, %v975
        %v977 = vpop.f32.mrf.mxu0
        %v978 = vpop.f32.mrf.mxu0
        %v979 = vadd.f32 %v819, %v978
        %v980 = vpop.f32.mrf.mxu0
        %981 = vmatprep.mubr.bf16.mxu0 0
        %982 = vmatmul.mubr.bf16.gmra.mxu0 %v857
        %v983 = vpop.f32.mrf.mxu0
        %v984 = vadd.f32 %v819, %v983
        %v985 = vpop.f32.mrf.mxu0
        %v986 = vpop.f32.mrf.mxu0
        %v987 = vadd.f32 %v819, %v986
        %v988 = vpop.f32.mrf.mxu0
        %989 = vmatprep.mubr.bf16.mxu0 0
        %990 = vmatmul.mubr.bf16.gmra.mxu0 %v858
        %v991 = vpop.f32.mrf.mxu0
        %v992 = vadd.f32 %v819, %v991
        %v993 = vpop.f32.mrf.mxu0
        %v994 = vpop.f32.mrf.mxu0
        %v995 = vadd.f32 %v819, %v994
        %v996 = vpop.f32.mrf.mxu0
        %997 = vmatprep.mubr.bf16.mxu0 0
        %998 = vmatmul.mubr.bf16.gmra.mxu0 %v859
        %v999 = vpop.f32.mrf.mxu0
        %v1000 = vadd.f32 %v819, %v999
        %v1001 = vpop.f32.mrf.mxu0
        %v1002 = vpop.f32.mrf.mxu0
        %v1003 = vadd.f32 %v819, %v1002
        %v1004 = vpop.f32.mrf.mxu0
        %1005 = vmatprep.mubr.bf16.mxu0 0
        %1006 = vmatmul.mubr.bf16.gmra.mxu0 %v860
        %v1007 = vpop.f32.mrf.mxu0
        %v1008 = vadd.f32 %v819, %v1007
        %v1009 = vpop.f32.mrf.mxu0
        %v1010 = vpop.f32.mrf.mxu0
        %v1011 = vadd.f32 %v819, %v1010
        %v1012 = vpop.f32.mrf.mxu0
        %1013 = vdwg.mxu0
        %v1014 = vmax.f32 %v952, 0.0
        %v1015 = vmax.f32 %v955, 0.0
        %v1016 = vmax.f32 %v960, 0.0
        %v1017 = vmax.f32 %v963, 0.0
        %v1018 = vmax.f32 %v968, 0.0
        %v1019 = vmax.f32 %v971, 0.0
        %v1020 = vmax.f32 %v976, 0.0
        %v1021 = vmax.f32 %v979, 0.0
        %v1022 = vmax.f32 %v984, 0.0
        %v1023 = vmax.f32 %v987, 0.0
        %v1024 = vmax.f32 %v992, 0.0
        %v1025 = vmax.f32 %v995, 0.0
        %v1026 = vmax.f32 %v1000, 0.0
        %v1027 = vmax.f32 %v1003, 0.0
        %v1028 = vmax.f32 %v1008, 0.0
        %v1029 = vmax.f32 %v1011, 0.0
        %v1030 = vpack.c.bf16 %v1015, %v1014
        %v1031 = vpack.c.bf16 %v1017, %v1016
        %v1032 = vpack.c.bf16 %v1019, %v1018
        %v1033 = vpack.c.bf16 %v1021, %v1020
        %v1034 = vpack.c.bf16 %v1023, %v1022
        %v1035 = vpack.c.bf16 %v1025, %v1024
        %v1036 = vpack.c.bf16 %v1027, %v1026
        %v1037 = vpack.c.bf16 %v1029, %v1028
        %v1038 = vld [vmem:[%s255] sm:$0xf]
        %v1039 = vld [vmem:[%s255 + $0x4] sm:$0xf]
        %v1040 = vld [vmem:[%s255 + $0x8] sm:$0xf]
        %v1041 = vld [vmem:[%s255 + $0xc] sm:$0xf]
        %v1042 = vld [vmem:[%s255 + $0x10] sm:$0xf]
        %v1043 = vld [vmem:[%s255 + $0x14] sm:$0xf]
        %v1044 = vld [vmem:[%s255 + $0x18] sm:$0xf]
        %v1045 = vld [vmem:[%s255 + $0x1c] sm:$0xf]
        %v1046 = vld [vmem:[%s255 + $0x20] sm:$0xf]
        %v1047 = vld [vmem:[%s255 + $0x24] sm:$0xf]
        %v1048 = vld [vmem:[%s255 + $0x28] sm:$0xf]
        %v1049 = vld [vmem:[%s255 + $0x2c] sm:$0xf]
        %v1050 = vld [vmem:[%s255 + $0x30] sm:$0xf]
        %v1051 = vld [vmem:[%s255 + $0x34] sm:$0xf]
        %v1052 = vld [vmem:[%s255 + $0x38] sm:$0xf]
        %v1053 = vld [vmem:[%s255 + $0x3c] sm:$0xf]
        %v1070 = vunpack.c.l.b16 %v1038
        %v1071 = vunpack.c.l.b16 %v1039
        %v1072 = vunpack.c.l.b16 %v1040
        %v1073 = vunpack.c.l.b16 %v1041
        %v1074 = vunpack.c.l.b16 %v1042
        %v1075 = vunpack.c.l.b16 %v1043
        %v1076 = vunpack.c.l.b16 %v1044
        %v1077 = vunpack.c.l.b16 %v1045
        %v1078 = vunpack.c.l.b16 %v1046
        %v1079 = vunpack.c.l.b16 %v1047
        %v1080 = vunpack.c.l.b16 %v1048
        %v1081 = vunpack.c.l.b16 %v1049
        %v1082 = vunpack.c.l.b16 %v1050
        %v1083 = vunpack.c.l.b16 %v1051
        %v1084 = vunpack.c.l.b16 %v1052
        %v1085 = vunpack.c.l.b16 %v1053
        %v1086 = vpack.c.b16 %v1071, %v1070
        %v1087 = vpack.c.b16 %v1073, %v1072
        %v1088 = vpack.c.b16 %v1075, %v1074
        %v1089 = vpack.c.b16 %v1077, %v1076
        %v1090 = vpack.c.b16 %v1079, %v1078
        %v1091 = vpack.c.b16 %v1081, %v1080
        %v1092 = vpack.c.b16 %v1083, %v1082
        %v1093 = vpack.c.b16 %v1085, %v1084
        %1102 = vmatprep.subr.bf16.mxu0 0
        %1103 = vmatpush1.bf16.msra.mxu0 %v1093
        %1104 = vmatprep.subr.bf16.mxu0 0
        %1105 = vmatpush1.bf16.msra.mxu0 %v1092
        %1106 = vmatprep.subr.bf16.mxu0 0
        %1107 = vmatpush1.bf16.msra.mxu0 %v1091
        %1108 = vmatprep.subr.bf16.mxu0 0
        %1109 = vmatpush1.bf16.msra.mxu0 %v1090
        %1110 = vmatprep.subr.bf16.mxu0 0
        %1111 = vmatpush1.bf16.msra.mxu0 %v1089
        %1112 = vmatprep.subr.bf16.mxu0 0
        %1113 = vmatpush1.bf16.msra.mxu0 %v1088
        %1114 = vmatprep.subr.bf16.mxu0 0
        %1115 = vmatpush1.bf16.msra.mxu0 %v1087
        %1116 = vmatprep.subr.bf16.mxu0 0
        %1117 = vmatpush1.bf16.msra.mxu0 %v1086
        %1118 = vmatprep.subr.bf16.mxu0 0
        %1119 = vmatpush2.bf16.msra.mxu0 0
        %1120 = vmatprep.subr.bf16.mxu0 0
        %1121 = vmatpush2.bf16.msra.mxu0 0
        %1122 = vmatprep.subr.bf16.mxu0 0
        %1123 = vmatpush2.bf16.msra.mxu0 0
        %1124 = vmatprep.subr.bf16.mxu0 0
        %1125 = vmatpush2.bf16.msra.mxu0 0
        %1126 = vmatprep.subr.bf16.mxu0 0
        %1127 = vmatpush2.bf16.msra.mxu0 0
        %1128 = vmatprep.subr.bf16.mxu0 0
        %1129 = vmatpush2.bf16.msra.mxu0 0
        %1130 = vmatprep.subr.bf16.mxu0 0
        %1131 = vmatpush2.bf16.msra.mxu0 0
        %1132 = vmatprep.subr.bf16.mxu0 0
        %1133 = vmatpush2.bf16.msra.mxu0 0
        %1134 = vmatprep.mubr.bf16.mxu0 0
        %1135 = vmatmul.mubr.bf16.gmra.mxu0 %v1030
        %v1136 = vpop.f32.mrf.mxu0
        %v1137 = vadd.f32 0.0, %v1136
        %v1138 = vpop.f32.mrf.mxu0
        %v1139 = vpop.f32.mrf.mxu0
        %v1140 = vadd.f32 0.0, %v1139
        %v1141 = vpop.f32.mrf.mxu0
        %1142 = vmatprep.mubr.bf16.mxu0 0
        %1143 = vmatmul.mubr.bf16.gmra.mxu0 %v1031
        %v1144 = vpop.f32.mrf.mxu0
        %v1145 = vadd.f32 0.0, %v1144
        %v1146 = vpop.f32.mrf.mxu0
        %v1147 = vpop.f32.mrf.mxu0
        %v1148 = vadd.f32 0.0, %v1147
        %v1149 = vpop.f32.mrf.mxu0
        %1150 = vmatprep.mubr.bf16.mxu0 0
        %1151 = vmatmul.mubr.bf16.gmra.mxu0 %v1032
        %v1152 = vpop.f32.mrf.mxu0
        %v1153 = vadd.f32 0.0, %v1152
        %v1154 = vpop.f32.mrf.mxu0
        %v1155 = vpop.f32.mrf.mxu0
        %v1156 = vadd.f32 0.0, %v1155
        %v1157 = vpop.f32.mrf.mxu0
        %1158 = vmatprep.mubr.bf16.mxu0 0
        %1159 = vmatmul.mubr.bf16.gmra.mxu0 %v1033
        %v1160 = vpop.f32.mrf.mxu0
        %v1161 = vadd.f32 0.0, %v1160
        %v1162 = vpop.f32.mrf.mxu0
        %v1163 = vpop.f32.mrf.mxu0
        %v1164 = vadd.f32 0.0, %v1163
        %v1165 = vpop.f32.mrf.mxu0
        %1166 = vmatprep.mubr.bf16.mxu0 0
        %1167 = vmatmul.mubr.bf16.gmra.mxu0 %v1034
        %v1168 = vpop.f32.mrf.mxu0
        %v1169 = vadd.f32 0.0, %v1168
        %v1170 = vpop.f32.mrf.mxu0
        %v1171 = vpop.f32.mrf.mxu0
        %v1172 = vadd.f32 0.0, %v1171
        %v1173 = vpop.f32.mrf.mxu0
        %1174 = vmatprep.mubr.bf16.mxu0 0
        %1175 = vmatmul.mubr.bf16.gmra.mxu0 %v1035
        %v1176 = vpop.f32.mrf.mxu0
        %v1177 = vadd.f32 0.0, %v1176
        %v1178 = vpop.f32.mrf.mxu0
        %v1179 = vpop.f32.mrf.mxu0
        %v1180 = vadd.f32 0.0, %v1179
        %v1181 = vpop.f32.mrf.mxu0
        %1182 = vmatprep.mubr.bf16.mxu0 0
        %1183 = vmatmul.mubr.bf16.gmra.mxu0 %v1036
        %v1184 = vpop.f32.mrf.mxu0
        %v1185 = vadd.f32 0.0, %v1184
        %v1186 = vpop.f32.mrf.mxu0
        %v1187 = vpop.f32.mrf.mxu0
        %v1188 = vadd.f32 0.0, %v1187
        %v1189 = vpop.f32.mrf.mxu0
        %1190 = vmatprep.mubr.bf16.mxu0 0
        %1191 = vmatmul.mubr.bf16.gmra.mxu0 %v1037
        %v1192 = vpop.f32.mrf.mxu0
        %v1193 = vadd.f32 0.0, %v1192
        %v1194 = vpop.f32.mrf.mxu0
        %v1195 = vpop.f32.mrf.mxu0
        %v1196 = vadd.f32 0.0, %v1195
        %v1197 = vpop.f32.mrf.mxu0
        %1198 = vdwg.mxu0
        %v1199 = vpack.c.bf16 %v1140, %v1137
        %v1200 = vpack.c.bf16 %v1148, %v1145
        %v1201 = vpack.c.bf16 %v1156, %v1153
        %v1202 = vpack.c.bf16 %v1164, %v1161
        %v1203 = vpack.c.bf16 %v1172, %v1169
        %v1204 = vpack.c.bf16 %v1180, %v1177
        %v1205 = vpack.c.bf16 %v1188, %v1185
        %v1206 = vpack.c.bf16 %v1196, %v1193
        %v1215 = vunpack.c.l.b16 %v1199
        %v1216 = vunpack.c.h.b16 %v1199
        %v1217 = vunpack.c.l.b16 %v1200
        %v1218 = vunpack.c.h.b16 %v1200
        %v1219 = vunpack.c.l.b16 %v1201
        %v1220 = vunpack.c.h.b16 %v1201
        %v1221 = vunpack.c.l.b16 %v1202
        %v1222 = vunpack.c.h.b16 %v1202
        %v1223 = vunpack.c.l.b16 %v1203
        %v1224 = vunpack.c.h.b16 %v1203
        %v1225 = vunpack.c.l.b16 %v1204
        %v1226 = vunpack.c.h.b16 %v1204
        %v1227 = vunpack.c.l.b16 %v1205
        %v1228 = vunpack.c.h.b16 %v1205
        %v1229 = vunpack.c.l.b16 %v1206
        %v1230 = vunpack.c.h.b16 %v1206
        %v1231 = vpack.c.b16 %v1215, %v1215
        %v1232 = vpack.c.b16 %v1216, %v1216
        %v1233 = vpack.c.b16 %v1217, %v1217
        %v1234 = vpack.c.b16 %v1218, %v1218
        %v1235 = vpack.c.b16 %v1219, %v1219
        %v1236 = vpack.c.b16 %v1220, %v1220
        %v1237 = vpack.c.b16 %v1221, %v1221
        %v1238 = vpack.c.b16 %v1222, %v1222
        %v1239 = vpack.c.b16 %v1223, %v1223
        %v1240 = vpack.c.b16 %v1224, %v1224
        %v1241 = vpack.c.b16 %v1225, %v1225
        %v1242 = vpack.c.b16 %v1226, %v1226
        %v1243 = vpack.c.b16 %v1227, %v1227
        %v1244 = vpack.c.b16 %v1228, %v1228
        %v1245 = vpack.c.b16 %v1229, %v1229
        %v1246 = vpack.c.b16 %v1230, %v1230
        %s1263 = sshra.s32 %s272, 3
        %s1264 = sand.u32 %s272, 7
        %s1265 = smul.addr %s1263, 4
        %s1266 = scalar_lea.vmem [#allocation3], %s1265
        %1267 = vst [vmem:[%s1266] sm:$0xf] %v1231
        %1268 = vst [vmem:[%s1266 + $0x4] sm:$0xf] %v1232
        %1269 = vst [vmem:[%s1266 + $0x8] sm:$0xf] %v1233
        %1270 = vst [vmem:[%s1266 + $0xc] sm:$0xf] %v1234
        %1271 = vst [vmem:[%s1266 + $0x10] sm:$0xf] %v1235
        %1272 = vst [vmem:[%s1266 + $0x14] sm:$0xf] %v1236
        %1273 = vst [vmem:[%s1266 + $0x18] sm:$0xf] %v1237
        %1274 = vst [vmem:[%s1266 + $0x1c] sm:$0xf] %v1238
        %1275 = vst [vmem:[%s1266 + $0x20] sm:$0xf] %v1239
        %1276 = vst [vmem:[%s1266 + $0x24] sm:$0xf] %v1240
        %1277 = vst [vmem:[%s1266 + $0x28] sm:$0xf] %v1241
        %1278 = vst [vmem:[%s1266 + $0x2c] sm:$0xf] %v1242
        %1279 = vst [vmem:[%s1266 + $0x30] sm:$0xf] %v1243
        %1280 = vst [vmem:[%s1266 + $0x34] sm:$0xf] %v1244
        %1281 = vst [vmem:[%s1266 + $0x38] sm:$0xf] %v1245
        %1282 = vst [vmem:[%s1266 + $0x3c] sm:$0xf] %v1246
      $region44: #{gcn_forward.1} parent=35 // pred_fallthru
        _
      %p1283 = scmp.eq.s32.totalorder %s19, 2
      // Predicated region
      $region45: #{gcn_forward.1} parent=35 // pred_check
        %p1284 = pneg %p1283
      $region46: #{gcn_forward.1} parent=35 // pred_check_branch
        %1286 = sbr.rel (%p1284) target = $region48
      $region47: #{gcn_forward.1} parent=35 // pred_region
        %v1287 = vld [vmem:[#allocation3] sm:$0xf]
        %v1288 = vld [vmem:[#allocation3 + $0x4] sm:$0xf]
        %v1289 = vld [vmem:[#allocation3 + $0x8] sm:$0xf]
        %v1290 = vld [vmem:[#allocation3 + $0xc] sm:$0xf]
        %v1291 = vld [vmem:[#allocation3 + $0x10] sm:$0xf]
        %v1292 = vld [vmem:[#allocation3 + $0x14] sm:$0xf]
        %v1293 = vld [vmem:[#allocation3 + $0x18] sm:$0xf]
        %v1294 = vld [vmem:[#allocation3 + $0x1c] sm:$0xf]
        %v1295 = vld [vmem:[#allocation3 + $0x20] sm:$0xf]
        %v1296 = vld [vmem:[#allocation3 + $0x24] sm:$0xf]
        %v1297 = vld [vmem:[#allocation3 + $0x28] sm:$0xf]
        %v1298 = vld [vmem:[#allocation3 + $0x2c] sm:$0xf]
        %v1299 = vld [vmem:[#allocation3 + $0x30] sm:$0xf]
        %v1300 = vld [vmem:[#allocation3 + $0x34] sm:$0xf]
        %v1301 = vld [vmem:[#allocation3 + $0x38] sm:$0xf]
        %v1302 = vld [vmem:[#allocation3 + $0x3c] sm:$0xf]
        %v1303 = vld [vmem:[%s247] sm:$0xf]
        %v1304 = vld [vmem:[%s247 + $0x4] sm:$0xf]
        %v1305 = vld [vmem:[%s247 + $0x8] sm:$0xf]
        %v1306 = vld [vmem:[%s247 + $0xc] sm:$0xf]
        %v1307 = vld [vmem:[%s247 + $0x10] sm:$0xf]
        %v1308 = vld [vmem:[%s247 + $0x14] sm:$0xf]
        %v1309 = vld [vmem:[%s247 + $0x18] sm:$0xf]
        %v1310 = vld [vmem:[%s247 + $0x1c] sm:$0xf]
        %v1311 = vld [vmem:[%s247 + $0x20] sm:$0xf]
        %v1312 = vld [vmem:[%s247 + $0x24] sm:$0xf]
        %v1313 = vld [vmem:[%s247 + $0x28] sm:$0xf]
        %v1314 = vld [vmem:[%s247 + $0x2c] sm:$0xf]
        %v1315 = vld [vmem:[%s247 + $0x30] sm:$0xf]
        %v1316 = vld [vmem:[%s247 + $0x34] sm:$0xf]
        %v1317 = vld [vmem:[%s247 + $0x38] sm:$0xf]
        %v1318 = vld [vmem:[%s247 + $0x3c] sm:$0xf]
        %v1319 = vld [vmem:[%s260] sm:$0x1]
        %v1321 = vlaneseq
        %v1322 = vshrl.u32 %v1321, 7
        %v1323 = vsub.s32 0, %v1322
        %v1324 = vrot.slane %v1319, %v1323
        %v1342 = vunpack.c.l.b16 %v1303
        %v1343 = vunpack.c.l.b16 %v1304
        %v1344 = vunpack.c.l.b16 %v1305
        %v1345 = vunpack.c.l.b16 %v1306
        %v1346 = vunpack.c.l.b16 %v1307
        %v1347 = vunpack.c.l.b16 %v1308
        %v1348 = vunpack.c.l.b16 %v1309
        %v1349 = vunpack.c.l.b16 %v1310
        %v1350 = vunpack.c.l.b16 %v1311
        %v1351 = vunpack.c.l.b16 %v1312
        %v1352 = vunpack.c.l.b16 %v1313
        %v1353 = vunpack.c.l.b16 %v1314
        %v1354 = vunpack.c.l.b16 %v1315
        %v1355 = vunpack.c.l.b16 %v1316
        %v1356 = vunpack.c.l.b16 %v1317
        %v1357 = vunpack.c.l.b16 %v1318
        %v1358 = vpack.c.b16 %v1343, %v1342
        %v1359 = vpack.c.b16 %v1345, %v1344
        %v1360 = vpack.c.b16 %v1347, %v1346
        %v1361 = vpack.c.b16 %v1349, %v1348
        %v1362 = vpack.c.b16 %v1351, %v1350
        %v1363 = vpack.c.b16 %v1353, %v1352
        %v1364 = vpack.c.b16 %v1355, %v1354
        %v1365 = vpack.c.b16 %v1357, %v1356
        %v1390 = vunpack.c.l.b16 %v1287
        %v1391 = vunpack.c.l.b16 %v1288
        %v1392 = vunpack.c.l.b16 %v1289
        %v1393 = vunpack.c.l.b16 %v1290
        %v1394 = vunpack.c.l.b16 %v1291
        %v1395 = vunpack.c.l.b16 %v1292
        %v1396 = vunpack.c.l.b16 %v1293
        %v1397 = vunpack.c.l.b16 %v1294
        %v1398 = vunpack.c.l.b16 %v1295
        %v1399 = vunpack.c.l.b16 %v1296
        %v1400 = vunpack.c.l.b16 %v1297
        %v1401 = vunpack.c.l.b16 %v1298
        %v1402 = vunpack.c.l.b16 %v1299
        %v1403 = vunpack.c.l.b16 %v1300
        %v1404 = vunpack.c.l.b16 %v1301
        %v1405 = vunpack.c.l.b16 %v1302
        %v1406 = vpack.c.b16 %v1391, %v1390
        %v1407 = vpack.c.b16 %v1393, %v1392
        %v1408 = vpack.c.b16 %v1395, %v1394
        %v1409 = vpack.c.b16 %v1397, %v1396
        %v1410 = vpack.c.b16 %v1399, %v1398
        %v1411 = vpack.c.b16 %v1401, %v1400
        %v1412 = vpack.c.b16 %v1403, %v1402
        %v1413 = vpack.c.b16 %v1405, %v1404
        %1422 = vmatprep.subr.bf16.mxu0 0
        %1423 = vmatpush1.bf16.msra.mxu0 %v1413
        %1424 = vmatprep.subr.bf16.mxu0 0
        %1425 = vmatpush1.bf16.msra.mxu0 %v1412
        %1426 = vmatprep.subr.bf16.mxu0 0
        %1427 = vmatpush1.bf16.msra.mxu0 %v1411
        %1428 = vmatprep.subr.bf16.mxu0 0
        %1429 = vmatpush1.bf16.msra.mxu0 %v1410
        %1430 = vmatprep.subr.bf16.mxu0 0
        %1431 = vmatpush1.bf16.msra.mxu0 %v1409
        %1432 = vmatprep.subr.bf16.mxu0 0
        %1433 = vmatpush1.bf16.msra.mxu0 %v1408
        %1434 = vmatprep.subr.bf16.mxu0 0
        %1435 = vmatpush1.bf16.msra.mxu0 %v1407
        %1436 = vmatprep.subr.bf16.mxu0 0
        %1437 = vmatpush1.bf16.msra.mxu0 %v1406
        %1438 = vmatprep.subr.bf16.mxu0 0
        %1439 = vmatpush2.bf16.msra.mxu0 0
        %1440 = vmatprep.subr.bf16.mxu0 0
        %1441 = vmatpush2.bf16.msra.mxu0 0
        %1442 = vmatprep.subr.bf16.mxu0 0
        %1443 = vmatpush2.bf16.msra.mxu0 0
        %1444 = vmatprep.subr.bf16.mxu0 0
        %1445 = vmatpush2.bf16.msra.mxu0 0
        %1446 = vmatprep.subr.bf16.mxu0 0
        %1447 = vmatpush2.bf16.msra.mxu0 0
        %1448 = vmatprep.subr.bf16.mxu0 0
        %1449 = vmatpush2.bf16.msra.mxu0 0
        %1450 = vmatprep.subr.bf16.mxu0 0
        %1451 = vmatpush2.bf16.msra.mxu0 0
        %1452 = vmatprep.subr.bf16.mxu0 0
        %1453 = vmatpush2.bf16.msra.mxu0 0
        %1454 = vmatprep.mubr.bf16.mxu0 0
        %1455 = vmatmul.mubr.bf16.gmra.mxu0 %v1358
        %v1456 = vpop.f32.mrf.mxu0
        %v1457 = vadd.f32 %v1324, %v1456
        %v1458 = vpop.f32.mrf.mxu0
        %v1459 = vpop.f32.mrf.mxu0
        %v1460 = vadd.f32 %v1324, %v1459
        %v1461 = vpop.f32.mrf.mxu0
        %1462 = vmatprep.mubr.bf16.mxu0 0
        %1463 = vmatmul.mubr.bf16.gmra.mxu0 %v1359
        %v1464 = vpop.f32.mrf.mxu0
        %v1465 = vadd.f32 %v1324, %v1464
        %v1466 = vpop.f32.mrf.mxu0
        %v1467 = vpop.f32.mrf.mxu0
        %v1468 = vadd.f32 %v1324, %v1467
        %v1469 = vpop.f32.mrf.mxu0
        %1470 = vmatprep.mubr.bf16.mxu0 0
        %1471 = vmatmul.mubr.bf16.gmra.mxu0 %v1360
        %v1472 = vpop.f32.mrf.mxu0
        %v1473 = vadd.f32 %v1324, %v1472
        %v1474 = vpop.f32.mrf.mxu0
        %v1475 = vpop.f32.mrf.mxu0
        %v1476 = vadd.f32 %v1324, %v1475
        %v1477 = vpop.f32.mrf.mxu0
        %1478 = vmatprep.mubr.bf16.mxu0 0
        %1479 = vmatmul.mubr.bf16.gmra.mxu0 %v1361
        %v1480 = vpop.f32.mrf.mxu0
        %v1481 = vadd.f32 %v1324, %v1480
        %v1482 = vpop.f32.mrf.mxu0
        %v1483 = vpop.f32.mrf.mxu0
        %v1484 = vadd.f32 %v1324, %v1483
        %v1485 = vpop.f32.mrf.mxu0
        %1486 = vmatprep.mubr.bf16.mxu0 0
        %1487 = vmatmul.mubr.bf16.gmra.mxu0 %v1362
        %v1488 = vpop.f32.mrf.mxu0
        %v1489 = vadd.f32 %v1324, %v1488
        %v1490 = vpop.f32.mrf.mxu0
        %v1491 = vpop.f32.mrf.mxu0
        %v1492 = vadd.f32 %v1324, %v1491
        %v1493 = vpop.f32.mrf.mxu0
        %1494 = vmatprep.mubr.bf16.mxu0 0
        %1495 = vmatmul.mubr.bf16.gmra.mxu0 %v1363
        %v1496 = vpop.f32.mrf.mxu0
        %v1497 = vadd.f32 %v1324, %v1496
        %v1498 = vpop.f32.mrf.mxu0
        %v1499 = vpop.f32.mrf.mxu0
        %v1500 = vadd.f32 %v1324, %v1499
        %v1501 = vpop.f32.mrf.mxu0
        %1502 = vmatprep.mubr.bf16.mxu0 0
        %1503 = vmatmul.mubr.bf16.gmra.mxu0 %v1364
        %v1504 = vpop.f32.mrf.mxu0
        %v1505 = vadd.f32 %v1324, %v1504
        %v1506 = vpop.f32.mrf.mxu0
        %v1507 = vpop.f32.mrf.mxu0
        %v1508 = vadd.f32 %v1324, %v1507
        %v1509 = vpop.f32.mrf.mxu0
        %1510 = vmatprep.mubr.bf16.mxu0 0
        %1511 = vmatmul.mubr.bf16.gmra.mxu0 %v1365
        %v1512 = vpop.f32.mrf.mxu0
        %v1513 = vadd.f32 %v1324, %v1512
        %v1514 = vpop.f32.mrf.mxu0
        %v1515 = vpop.f32.mrf.mxu0
        %v1516 = vadd.f32 %v1324, %v1515
        %v1517 = vpop.f32.mrf.mxu0
        %1518 = vdwg.mxu0
        %1519 = vst [vmem:[%s267] sm:$0xff] %v1457
        %1520 = vst [vmem:[%s267 + $0x8] sm:$0xff] %v1460
        %1521 = vst [vmem:[%s267 + $0x10] sm:$0xff] %v1465
        %1522 = vst [vmem:[%s267 + $0x18] sm:$0xff] %v1468
        %1523 = vst [vmem:[%s267 + $0x20] sm:$0xff] %v1473
        %1524 = vst [vmem:[%s267 + $0x28] sm:$0xff] %v1476
        %1525 = vst [vmem:[%s267 + $0x30] sm:$0xff] %v1481
        %1526 = vst [vmem:[%s267 + $0x38] sm:$0xff] %v1484
        %1527 = vst [vmem:[%s267 + $0x40] sm:$0xff] %v1489
        %1528 = vst [vmem:[%s267 + $0x48] sm:$0xff] %v1492
        %1529 = vst [vmem:[%s267 + $0x50] sm:$0xff] %v1497
        %1530 = vst [vmem:[%s267 + $0x58] sm:$0xff] %v1500
        %1531 = vst [vmem:[%s267 + $0x60] sm:$0xff] %v1505
        %1532 = vst [vmem:[%s267 + $0x68] sm:$0xff] %v1508
        %1533 = vst [vmem:[%s267 + $0x70] sm:$0xff] %v1513
        %1534 = vst [vmem:[%s267 + $0x78] sm:$0xff] %v1516
      $region48: #{gcn_forward.1} parent=35 // pred_fallthru
        _
      %p1535 = scmp.eq.s32.totalorder %s19, 2
      %s1536 = scalar_select %p1535, %s20, 0
      %s1537 = smul.u32 16, %s1536
      %p1538 = scmp.lt.s32.totalorder %s1537, 15
      %s1539 = scalar_select %p1538, %s1537, 15
      %s1540 = smul.addr %s1539, 8
      %s1541 = scalar_lea.vmem %s4, %s1540
      // Predicated region
      $region49: #{gcn_forward.1} parent=35 // pred_check
        %p1542 = pneg %p152
      $region50: #{gcn_forward.1} parent=35 // pred_check_branch
        %1544 = sbr.rel (%p1542) target = $region52
      $region51: #{gcn_forward.1} parent=35 // pred_region
        %p1545 = scmp.eq.s32.totalorder %s19, 2
        %s1546 = scalar_select %p1545, %s20, 0
        %s1547 = smul.u32 16, %s1546
      $region52: #{gcn_forward.1} parent=35 // pred_fallthru
        _
    $region36: #{gcn_forward.1} parent=5 // pred_fallthru
      _
    %p1548 = scmp.le.s32.totalorder 2, %s10
    // Predicated region
    $region53: #{gcn_forward.1} parent=5 // pred_check
      %p1549 = pneg %p1548
    $region54: #{gcn_forward.1} parent=5 // pred_check_branch
      %1551 = sbr.rel (%p1549) target = $region56
    $region55: #{gcn_forward.1} parent=5 // pred_region
      %s1552 = ssub.s32 %s10, 2
      // Predicated region
      $region57: #{gcn_forward.1} parent=55 // pred_check
        %p1553 = pneg %p158
      $region58: #{gcn_forward.1} parent=55 // pred_check_branch
        %1555 = sbr.rel (%p1553) target = $region60
      $region59: #{gcn_forward.1} parent=55 // pred_region
        %p1556 = scmp.eq.s32.totalorder %s21, 2
        %s1557 = scalar_select %p1556, %s22, 0
        %s1558 = smul.u32 16, %s1557
        %p1559 = scmp.lt.s32.totalorder %s1558, 15
        %s1560 = scalar_select %p1559, %s1558, 15
        %s1561 = smul.addr %s1560, 8
        %s1562 = scalar_lea.vmem %s4, %s1561
      $region60: #{gcn_forward.1} parent=55 // pred_fallthru
        _
    $region56: #{gcn_forward.1} parent=5 // pred_fallthru
      _
  $region6: #{gcn_forward.1} parent=0 // loop_footer
    %s14 = sadd.s32 1, %s10
  $region7: #{gcn_forward.1} parent=0 // loop_footer_branch
    %9 = sbr.rel target = $region3
  $region8: #{gcn_forward.1} parent=0 // loop_exit
    _

</llo_original>
